<compile_context>
chip_gen: v6e
topology: v6e:2x2x1
jax: 0.10.0
libtpu: 0.0.40
codegen_flags: <defaults>
</compile_context>

<pallas_src>
import functools

import jax
import jax.numpy as jnp
from jax import lax
from jax.experimental import pallas as pl
from jax.experimental.pallas import tpu as pltpu

EPS = 1e-5   # torch BatchNorm default eps
C = 32       # conv out-channels (Conv2d(1, 32, 3))


# ---------------- Kernel 1: conv (+bn0/bn1 folded) + ReLU, both branches ----------------

def _conv_stage_kernel(cols_ref, wg_ref, bg_ref, wr_ref, br_ref, hg_ref, hr_ref):
    cols = cols_ref[...]                                             # (B*P, 9), shared
    hg_ref[...] = jnp.maximum(
        jnp.dot(cols, wg_ref[...], preferred_element_type=jnp.float32) + bg_ref[...], 0.0)
    hr_ref[...] = jnp.maximum(
        jnp.dot(cols, wr_ref[...], preferred_element_type=jnp.float32) + br_ref[...], 0.0)


def _conv_call(cols, wg, bg, wr, br):
    BP = cols.shape[0]

    def _full(x):
        nd = x.ndim
        return pl.BlockSpec(x.shape, lambda i, _nd=nd: (0,) * _nd)

    return pl.pallas_call(
        _conv_stage_kernel,
        out_shape=(jax.ShapeDtypeStruct((BP, C), jnp.float32),
                   jax.ShapeDtypeStruct((BP, C), jnp.float32)),
        grid=(1,),
        in_specs=[_full(cols), _full(wg), _full(bg), _full(wr), _full(br)],
        out_specs=(pl.BlockSpec((BP, C), lambda i: (0, 0)),
                   pl.BlockSpec((BP, C), lambda i: (0, 0))),
        compiler_params=pltpu.CompilerParams(dimension_semantics=("arbitrary",)),
    )(cols, wg, bg, wr, br)


# ---------------- Kernel 2: fused fc + entity matmul + sigmoid + mask + softmax blend ----------------

def _head_kernel(feat_g_ref, fcw_g_ref, fcb_g_ref,
                 feat_r_ref, fcw_r_ref, fcb_r_ref,
                 embg_ref, bentg_ref, cv_ref,
                 embr_ref, bentr_ref, ct_ref,
                 out_ref,
                 h3g_s, h3r_s, lg_s, lr_s,
                 *, alpha):
    p = pl.program_id(0)     # 0 = stats pass (softmax denominator), 1 = write pass
    j = pl.program_id(1)     # entity-tile index

    @pl.when((p == 0) & (j == 0))
    def _init():
        # fc(+bn2 folded)+ReLU is entity-independent: compute once, keep in VMEM scratch.
        h3g_s[...] = jnp.maximum(
            jnp.dot(feat_g_ref[...], fcw_g_ref[...],
                    preferred_element_type=jnp.float32) + fcb_g_ref[...], 0.0)
        h3r_s[...] = jnp.maximum(
            jnp.dot(feat_r_ref[...], fcw_r_ref[...],
                    preferred_element_type=jnp.float32) + fcb_r_ref[...], 0.0)
        lg_s[...] = jnp.zeros_like(lg_s)
        lr_s[...] = jnp.zeros_like(lr_s)

    def _exp_scores(h3_s, emb_ref, bent_ref, vocab_ref):
        # x @ emb_e.T + b  (bf16 weight stream, f32 accumulate) -> sigmoid -> + encoded_mask.
        logits = jnp.dot(h3_s[...].astype(emb_ref.dtype), emb_ref[...],
                         preferred_element_type=jnp.float32) + bent_ref[...]
        pred = pl.reciprocal(1.0 + jnp.exp(-logits), approx=True)     # sigmoid on EUP
        mask = jnp.where(vocab_ref[...] != 0.0, 1.0, -50.0)
        # Masked scores live in (-50, ~2] -> exp() is overflow/underflow safe without a
        # running max; softmax is shift-invariant so only the row-sum is needed.
        return jnp.exp(pred + mask)                                   # (B, TN)

    eg = _exp_scores(h3g_s, embg_ref, bentg_ref, cv_ref)
    er = _exp_scores(h3r_s, embr_ref, bentr_ref, ct_ref)

    @pl.when(p == 0)
    def _accumulate():
        lg_s[...] += jnp.sum(eg, axis=1, keepdims=True)
        lr_s[...] += jnp.sum(er, axis=1, keepdims=True)

    @pl.when(p == 1)
    def _finalize():
        soft_g = eg * pl.reciprocal(lg_s[...], approx=True)
        soft_r = er * pl.reciprocal(lr_s[...], approx=True)
        out_ref[...] = jnp.log(alpha * soft_r + (1.0 - alpha) * soft_g)


def _pick_tile(E):
    # Largest lane-dense tile that divides E (fewer grid steps, unmasked stores).
    for tn in (2048, 1024, 512, 256, 128):
        if E % tn == 0:
            return tn
    return E   # full extent is always a legal block


def _head_call(feat_g, fcw_g, fcb_g, feat_r, fcw_r, fcb_r,
               embg, bentg, cv, embr, bentr, ct, alpha):
    B = feat_g.shape[0]
    h = fcw_g.shape[1]
    E = embg.shape[1]
    TN = _pick_tile(E)
    NT = E // TN

    def _const(shape):
        nd = len(shape)
        return pl.BlockSpec(shape, lambda p, j, _nd=nd: (0,) * _nd)

    def _etile(rows):
        return pl.BlockSpec((rows, TN), lambda p, j: (0, j))

    kernel = functools.partial(_head_kernel, alpha=alpha)
    return pl.pallas_call(
        kernel,
        out_shape=jax.ShapeDtypeStruct((B, E), jnp.float32),
        grid_spec=pltpu.PrefetchScalarGridSpec(
            num_scalar_prefetch=0,
            grid=(2, NT),
            in_specs=[
                _const(feat_g.shape), _const(fcw_g.shape), _const(fcb_g.shape),
                _const(feat_r.shape), _const(fcw_r.shape), _const(fcb_r.shape),
                _etile(h), _etile(1), _etile(B),
                _etile(h), _etile(1), _etile(B),
            ],
            # out block index stays (0,0) during the stats pass -> no garbage writebacks;
            # each tile is written exactly once in the write pass.
            out_specs=pl.BlockSpec((B, TN), lambda p, j: (0, p * j)),
            scratch_shapes=[pltpu.VMEM((B, h), jnp.float32),
                            pltpu.VMEM((B, h), jnp.float32),
                            pltpu.VMEM((B, 1), jnp.float32),
                            pltpu.VMEM((B, 1), jnp.float32)]),
        compiler_params=pltpu.CompilerParams(
            dimension_semantics=("arbitrary", "arbitrary"),
            vmem_limit_bytes=32 * 1024 * 1024),
    )(feat_g, fcw_g, fcb_g, feat_r, fcw_r, fcb_r, embg, bentg, cv, embr, bentr, ct)


# ---------------- parameter prep (host-side folding / layout glue) ----------------

def make_tconve_params(key, num_entities, h_dim, emb_dim1, emb_dim2):
    d1, d2 = emb_dim1, emb_dim2
    OH, OW = 3 * d1 - 2, d2 - 2
    P = OH * OW
    hidden_size = C * P
    ks = jax.random.split(key, 9)

    conv_w = jax.random.normal(ks[0], (C, 1, 3, 3), jnp.float32) * 0.1     # Conv2d(1,32,3)
    conv_b = jax.random.normal(ks[1], (C,), jnp.float32) * 0.1
    fc_w = jax.random.normal(ks[2], (h_dim, hidden_size), jnp.float32) * 0.05  # Linear(hidden,h)
    fc_b = jax.random.normal(ks[3], (h_dim,), jnp.float32) * 0.05
    emb_e = jax.random.normal(ks[4], (num_entities, h_dim), jnp.float32) * 0.1  # Embedding
    b_ent = jnp.zeros((num_entities,), jnp.float32)                        # Parameter(zeros)
    bn1_gamma = jax.random.uniform(ks[5], (C,), jnp.float32, minval=0.5, maxval=1.5)
    bn1_beta = jax.random.normal(ks[6], (C,), jnp.float32) * 0.1
    bn2_gamma = jax.random.uniform(ks[7], (h_dim,), jnp.float32, minval=0.5, maxval=1.5)
    bn2_beta = jax.random.normal(ks[8], (h_dim,), jnp.float32) * 0.1

    raw = dict(conv_w=conv_w, conv_b=conv_b, fc_w=fc_w, fc_b=fc_b,
               emb_e=emb_e, b_ent=b_ent,
               bn1_gamma=bn1_gamma, bn1_beta=bn1_beta,
               bn2_gamma=bn2_gamma, bn2_beta=bn2_beta)

    # Eval-mode BatchNorm affines (running_mean=0, running_var=1):
    inv = 1.0 / jnp.sqrt(1.0 + EPS)
    bn0_s, bn0_sh = inv, 0.0                         # bn0 defaults: gamma=1, beta=0
    bn1_s, bn1_sh = bn1_gamma * inv, bn1_beta
    bn2_s, bn2_sh = bn2_gamma * inv, bn2_beta

    # Fold bn0 (input affine) + bn1 (output affine) into the im2col conv weights:
    #   relu(bn1(conv(bn0(x)))) == relu(cols @ Wc + bc)
    w9 = conv_w.reshape(C, 9).T                                           # (9, C), k = ki*3+kj
    conv_w_eff = (w9 * bn0_s) * bn1_s[None, :]
    conv_b_eff = bn1_s * (conv_b + bn0_sh * jnp.sum(w9, axis=0)) + bn1_sh

    # Permute fc input dim from torch channel-major flatten (c*P+p) to the kernel's
    # row-major flatten (p*C+c), then fold bn2:  relu(bn2(x@W.T+b)) == relu(x@W'+b').
    fc_w_perm = fc_w.reshape(h_dim, C, P).transpose(0, 2, 1).reshape(h_dim, P * C).T
    fc_w_eff = fc_w_perm * bn2_s[None, :]
    fc_b_eff = fc_b * bn2_s + bn2_sh

    kernel_params = dict(
        conv_w=conv_w_eff,                            # (9, C)  bn0/bn1 folded
        conv_b=conv_b_eff.reshape(1, C),
        fc_w=fc_w_eff,                                # (P*C, h) bn2 folded, permuted
        fc_b=fc_b_eff.reshape(1, h_dim),
        emb_e_T=emb_e.T.astype(jnp.bfloat16),         # (h, E) bf16 weight stream
        b_ent=b_ent.reshape(1, num_entities),
    )
    return dict(raw=raw, kernel=kernel_params)


# ---------------- link_prediction forward ----------------

def link_prediction_forward(params, quadruple, copy_vocabulary, candidate_table, entity):
    ent_emb = params['ent_init_embeds']
    rel_emb = params['w_relation']
    tim_emb = params['tim_init_embeds']

    # get_s_p_o (embedding gathers — layout glue)
    s = ent_emb[quadruple[:, 0]]
    p = rel_emb[quadruple[:, 1]]       # p_o == p_s
    o = ent_emb[quadruple[:, 2]]

    # get_init_time: T = tim_init_embeds * (t // time_stamp + 1)
    t_idx = quadruple[:, 3] // params['time_stamp']
    T = tim_emb[0][None, :] * (t_idx.astype(jnp.float32) + 1.0)[:, None]

    e1 = s if entity == 'object' else o
    d1, d2 = params['emb_dim1'], params['emb_dim2']
    B = e1.shape[0]

    # stacked inputs + im2col (layout glue; shared by global & recent branches)
    stacked = jnp.concatenate([e1.reshape(B, d1, d2), p.reshape(B, d1, d2),
                               T.reshape(B, d1, d2)], axis=1)            # (B, 3*d1, d2)
    H, W = 3 * d1, d2
    OH, OW = H - 2, W - 2
    P_sp = OH * OW
    patches = [stacked[:, ki:ki + OH, kj:kj + OW] for ki in range(3) for kj in range(3)]
    cols = jnp.stack(patches, axis=-1).reshape(B * P_sp, 9)             # tiny, read once

    tg = params['tconve_global']['kernel']
    tr = params['tconve_recent']['kernel']

    # Kernel 1: conv(+bn0/bn1)+ReLU for both branches, one shared cols DMA.
    h1_g, h1_r = _conv_call(cols, tg['conv_w'], tg['conv_b'], tr['conv_w'], tr['conv_b'])

    # Flatten (layout glue); fc weights were permuted to this (p-major, c-minor) order.
    feat_g = h1_g.reshape(B, P_sp * C)
    feat_r = h1_r.reshape(B, P_sp * C)

    # Kernel 2: fused fc+bn2+relu, entity matmul, sigmoid, mask, two-branch softmax,
    # alpha-blend, log — streamed over lane-dense entity tiles (his_len != 0 branch).
    return _head_call(feat_g, tg['fc_w'], tg['fc_b'],
                      feat_r, tr['fc_w'], tr['fc_b'],
                      tg['emb_e_T'], tg['b_ent'], copy_vocabulary.astype(jnp.float32),
                      tr['emb_e_T'], tr['b_ent'], candidate_table.astype(jnp.float32),
                      params['alpha'])


# ---------------- pure-JAX reference (torch semantics, eval mode) ----------------

def _reference_forward(params, quadruple, copy_vocabulary, candidate_table, entity):
    ent_emb = params['ent_init_embeds']
    rel_emb = params['w_relation']
    tim_emb = params['tim_init_embeds']
    s = ent_emb[quadruple[:, 0]]
    p = rel_emb[quadruple[:, 1]]
    o = ent_emb[quadruple[:, 2]]
    t_idx = quadruple[:, 3] // params['time_stamp']
    T = tim_emb[0][None, :] * (t_idx.astype(jnp.float32) + 1.0)[:, None]
    e1 = s if entity == 'object' else o
    d1, d2 = params['emb_dim1'], params['emb_dim2']
    B = e1.shape[0]
    inv = 1.0 / jnp.sqrt(1.0 + EPS)

    def tconve(raw):
        x = jnp.concatenate([e1.reshape(B, 1, d1, d2), p.reshape(B, 1, d1, d2),
                             T.reshape(B, 1, d1, d2)], axis=2)           # (B,1,3d1,d2)
        x = x * inv                                                      # bn0 (eval defaults)
        x = lax.conv_general_dilated(x, raw['conv_w'], (1, 1), 'VALID',
                                     dimension_numbers=('NCHW', 'OIHW', 'NCHW'))
        x = x + raw['conv_b'][None, :, None, None]
        x = x * (raw['bn1_gamma'] * inv)[None, :, None, None] + raw['bn1_beta'][None, :, None, None]
        x = jnp.maximum(x, 0.0)
        x = x.reshape(B, -1)                                             # channel-major flatten
        x = x @ raw['fc_w'].T + raw['fc_b']
        x = x * (raw['bn2_gamma'] * inv) + raw['bn2_beta']
        x = jnp.maximum(x, 0.0)
        logits = x @ raw['emb_e'].T + raw['b_ent']
        return jax.nn.sigmoid(logits)

    pred_g = tconve(params['tconve_global']['raw'])
    pred_r = tconve(params['tconve_recent']['raw'])
    mask_g = jnp.where(copy_vocabulary != 0, 1.0, -50.0)
    mask_r = jnp.where(candidate_table != 0, 1.0, -50.0)
    sg = jax.nn.softmax(pred_g + mask_g, axis=1)
    sr = jax.nn.softmax(pred_r + mask_r, axis=1)
    a = params['alpha']
    return jnp.log(a * sr + (1.0 - a) * sg)


# ---------------- main ----------------

if __name__ == "__main__":
    B = 8            # batch of quadruples
    h_dim = 32       # embedding_dim / hidden_dim
    emb_dim1 = 4     # embedding_shape1
    emb_dim2 = h_dim // emb_dim1
    i_dim = 1024     # num entities (output_dim) -> a single lane-dense entity tile of 1024
    num_rels = 10
    num_times = 16
    alpha = 0.5      # args.alpha

    key = jax.random.PRNGKey(0)
    k_ent, k_rel, k_tim, k_g, k_r, k_q, k_cv, k_ct = jax.random.split(key, 8)

    params = {
        'ent_init_embeds': jax.random.normal(k_ent, (i_dim, h_dim), jnp.float32) * 0.1,
        'w_relation': jax.random.normal(k_rel, (num_rels, h_dim), jnp.float32) * 0.1,
        'tim_init_embeds': jax.random.normal(k_tim, (1, h_dim), jnp.float32) * 0.1,
        'tconve_global': make_tconve_params(k_g, i_dim, h_dim, emb_dim1, emb_dim2),
        'tconve_recent': make_tconve_params(k_r, i_dim, h_dim, emb_dim1, emb_dim2),
        'alpha': alpha,
        'time_stamp': 1,
        'emb_dim1': emb_dim1,
        'emb_dim2': emb_dim2,
    }

    kq1, kq2, kq3, kq4 = jax.random.split(k_q, 4)
    quadruple = jnp.stack([
        jax.random.randint(kq1, (B,), 0, i_dim),
        jax.random.randint(kq2, (B,), 0, num_rels),
        jax.random.randint(kq3, (B,), 0, i_dim),
        jax.random.randint(kq4, (B,), 0, num_times),
    ], axis=1).astype(jnp.int32)

    copy_vocabulary = (jax.random.uniform(k_cv, (B, i_dim)) > 0.7).astype(jnp.float32)
    candidate_table = (jax.random.uniform(k_ct, (B, i_dim)) > 0.7).astype(jnp.float32)

    out = link_prediction_forward(params, quadruple, copy_vocabulary,
                                  candidate_table, entity='object')
    out = jax.block_until_ready(out)
    assert out.shape == (B, i_dim) and out.dtype == jnp.float32

    # Sanity check against a pure-JAX reference of the torch module (loose tolerance:
    # the kernel streams the entity table in bf16 and uses approximate reciprocals).
    ref = jax.block_until_ready(
        _reference_forward(params, quadruple, copy_vocabulary, candidate_table, 'object'))
    assert bool(jnp.allclose(out, ref, atol=5e-2, rtol=5e-2)), \
        f"max abs err {float(jnp.max(jnp.abs(out - ref)))}"

    print("KERNEL_OK")
</pallas_src>

<mosaic_0001>
module attributes {stable_mosaic.version = 11 : i64} {
  func.func @_conv_stage_kernel(%arg0: i32, %arg1: memref<480x9xf32, #tpu.memory_space<vmem>>, %arg2: memref<9x32xf32, #tpu.memory_space<vmem>>, %arg3: memref<1x32xf32, #tpu.memory_space<vmem>>, %arg4: memref<9x32xf32, #tpu.memory_space<vmem>>, %arg5: memref<1x32xf32, #tpu.memory_space<vmem>>, %arg6: memref<480x32xf32, #tpu.memory_space<vmem>>, %arg7: memref<480x32xf32, #tpu.memory_space<vmem>>) attributes {dimension_semantics = [#tpu.dimension_semantics<arbitrary>], iteration_bounds = array<i64: 1>, scalar_prefetch = 0 : i64, scratch_operands = 0 : i64, tpu.core_type = #tpu.core_type<tc>, window_params = [{pipeline_mode = #tpu.pipeline_mode<synchronous>, transform_indices = @transform_0, window_bounds = array<i64: 480, 9>}, {pipeline_mode = #tpu.pipeline_mode<synchronous>, transform_indices = @transform_1, window_bounds = array<i64: 9, 32>}, {pipeline_mode = #tpu.pipeline_mode<synchronous>, transform_indices = @transform_2, window_bounds = array<i64: 1, 32>}, {pipeline_mode = #tpu.pipeline_mode<synchronous>, transform_indices = @transform_3, window_bounds = array<i64: 9, 32>}, {pipeline_mode = #tpu.pipeline_mode<synchronous>, transform_indices = @transform_4, window_bounds = array<i64: 1, 32>}, {pipeline_mode = #tpu.pipeline_mode<synchronous>, transform_indices = @transform_5, window_bounds = array<i64: 480, 32>}, {pipeline_mode = #tpu.pipeline_mode<synchronous>, transform_indices = @transform_6, window_bounds = array<i64: 480, 32>}]} {
    %c0 = arith.constant 0 : index
    %c0_0 = arith.constant 0 : index
    %0 = vector.load %arg1[%c0, %c0_0] : memref<480x9xf32, #tpu.memory_space<vmem>>, vector<480x9xf32>
    %c0_1 = arith.constant 0 : index
    %c0_2 = arith.constant 0 : index
    %1 = vector.load %arg2[%c0_1, %c0_2] : memref<9x32xf32, #tpu.memory_space<vmem>>, vector<9x32xf32>
    %cst = arith.constant dense<0.000000e+00> : vector<480x32xf32>
    %2 = tpu.matmul %0, %1, %cst {dimension_numbers = #tpu.dot_dimension_numbers<[1], [0], [0], [1], [0, 0, 1, 1], [], []>} : vector<480x9xf32>, vector<9x32xf32>, vector<480x32xf32> -> vector<480x32xf32>
    %c0_3 = arith.constant 0 : index
    %c0_4 = arith.constant 0 : index
    %3 = vector.load %arg3[%c0_3, %c0_4] : memref<1x32xf32, #tpu.memory_space<vmem>>, vector<1x32xf32>
    %4 = vector.broadcast %3 : vector<1x32xf32> to vector<480x32xf32>
    %5 = arith.addf %2, %4 : vector<480x32xf32>
    %cst_5 = arith.constant 0.000000e+00 : f32
    %6 = vector.broadcast %cst_5 : f32 to vector<480x32xf32>
    %7 = arith.maximumf %5, %6 : vector<480x32xf32>
    %c0_6 = arith.constant 0 : index
    %c0_7 = arith.constant 0 : index
    %8 = vector.load %arg6[%c0_6, %c0_7] : memref<480x32xf32, #tpu.memory_space<vmem>>, vector<480x32xf32>
    tpu.vector_store %arg6[%c0_6, %c0_7], %7 {strides = array<i32>} : memref<480x32xf32, #tpu.memory_space<vmem>>, vector<480x32xf32>,
    %c0_8 = arith.constant 0 : index
    %c0_9 = arith.constant 0 : index
    %9 = vector.load %arg4[%c0_8, %c0_9] : memref<9x32xf32, #tpu.memory_space<vmem>>, vector<9x32xf32>
    %cst_10 = arith.constant dense<0.000000e+00> : vector<480x32xf32>
    %10 = tpu.matmul %0, %9, %cst_10 {dimension_numbers = #tpu.dot_dimension_numbers<[1], [0], [0], [1], [0, 0, 1, 1], [], []>} : vector<480x9xf32>, vector<9x32xf32>, vector<480x32xf32> -> vector<480x32xf32>
    %c0_11 = arith.constant 0 : index
    %c0_12 = arith.constant 0 : index
    %11 = vector.load %arg5[%c0_11, %c0_12] : memref<1x32xf32, #tpu.memory_space<vmem>>, vector<1x32xf32>
    %12 = vector.broadcast %11 : vector<1x32xf32> to vector<480x32xf32>
    %13 = arith.addf %10, %12 : vector<480x32xf32>
    %cst_13 = arith.constant 0.000000e+00 : f32
    %14 = vector.broadcast %cst_13 : f32 to vector<480x32xf32>
    %15 = arith.maximumf %13, %14 : vector<480x32xf32>
    %c0_14 = arith.constant 0 : index
    %c0_15 = arith.constant 0 : index
    %16 = vector.load %arg7[%c0_14, %c0_15] : memref<480x32xf32, #tpu.memory_space<vmem>>, vector<480x32xf32>
    tpu.vector_store %arg7[%c0_14, %c0_15], %15 {strides = array<i32>} : memref<480x32xf32, #tpu.memory_space<vmem>>, vector<480x32xf32>,
    return
  }
  func.func @transform_0(%arg0: i32) -> (i32, i32) {
    %c0_i32 = arith.constant 0 : i32
    %c0_i32_0 = arith.constant 0 : i32
    %c0_i32_1 = arith.constant 0 : i32
    return %c0_i32, %c0_i32_0 : i32, i32
  }
  func.func @transform_1(%arg0: i32) -> (i32, i32) {
    %c0_i32 = arith.constant 0 : i32
    %c0_i32_0 = arith.constant 0 : i32
    %c0_i32_1 = arith.constant 0 : i32
    return %c0_i32, %c0_i32_0 : i32, i32
  }
  func.func @transform_2(%arg0: i32) -> (i32, i32) {
    %c0_i32 = arith.constant 0 : i32
    %c0_i32_0 = arith.constant 0 : i32
    %c0_i32_1 = arith.constant 0 : i32
    return %c0_i32, %c0_i32_0 : i32, i32
  }
  func.func @transform_3(%arg0: i32) -> (i32, i32) {
    %c0_i32 = arith.constant 0 : i32
    %c0_i32_0 = arith.constant 0 : i32
    %c0_i32_1 = arith.constant 0 : i32
    return %c0_i32, %c0_i32_0 : i32, i32
  }
  func.func @transform_4(%arg0: i32) -> (i32, i32) {
    %c0_i32 = arith.constant 0 : i32
    %c0_i32_0 = arith.constant 0 : i32
    %c0_i32_1 = arith.constant 0 : i32
    return %c0_i32, %c0_i32_0 : i32, i32
  }
  func.func @transform_5(%arg0: i32) -> (i32, i32) {
    %c0_i32 = arith.constant 0 : i32
    %c0_i32_0 = arith.constant 0 : i32
    %c0_i32_1 = arith.constant 0 : i32
    return %c0_i32, %c0_i32_0 : i32, i32
  }
  func.func @transform_6(%arg0: i32) -> (i32, i32) {
    %c0_i32 = arith.constant 0 : i32
    %c0_i32_0 = arith.constant 0 : i32
    %c0_i32_1 = arith.constant 0 : i32
    return %c0_i32, %c0_i32_0 : i32, i32
  }
}

</mosaic_0001>

<llo_original>
// kernel: tpu_custom_call.1
$region0: #{tpu_custom_call.1}
  #allocation0 [shape = 'u32[]', space=smem, size = 0x4, offset = 0x4, fixed_abs, tag = 'smem constant byte address 0x4 - core index']
  #allocation1 [shape = 'u32[144,128]{1,0:T(1,128)}', space=vmem, size = 0x12000, scoped, tag = 'internal scratch']
  %s0 = inlined_call_operand.vmem [shape: f32[480,9], index: 0, kind: input, shape index: {}]
  %s1 = inlined_call_operand.vmem [shape: f32[9,32], index: 1, kind: input, shape index: {}]
  %s2 = inlined_call_operand.vmem [shape: f32[1,32], index: 2, kind: input, shape index: {}]
  %s3 = inlined_call_operand.vmem [shape: f32[9,32], index: 3, kind: input, shape index: {}]
  %s4 = inlined_call_operand.vmem [shape: f32[1,32], index: 4, kind: input, shape index: {}]
  %s5 = inlined_call_operand.vmem [shape: f32[480,32], index: 5, kind: output, shape index: {0}]
  %s6 = inlined_call_operand.vmem [shape: f32[480,32], index: 6, kind: output, shape index: {1}]
  %7 = xla_tuple %s5, %s6
  %s8 = sld [smem:[#allocation0]]
  $region38: #{tpu_custom_call.1} parent=0
    _
  %s10 = ssub.s32 1, %s8
  %s11 = scalar_select 0, %s10, %s8
  // Predicated region
  $region2: #{tpu_custom_call.1} parent=0 // pred_check
    _
  $region3: #{tpu_custom_call.1} parent=0 // pred_check_branch
    %13 = sbr.rel (0) target = $region5
  $region4: #{tpu_custom_call.1} parent=0 // pred_region
    _
  $region5: #{tpu_custom_call.1} parent=0 // pred_fallthru
    _
  // Predicated region
  $region6: #{tpu_custom_call.1} parent=0 // pred_check
    _
  $region7: #{tpu_custom_call.1} parent=0 // pred_check_branch
    %15 = sbr.rel (0) target = $region9
  $region8: #{tpu_custom_call.1} parent=0 // pred_region
    _
  $region9: #{tpu_custom_call.1} parent=0 // pred_fallthru
    _
  // Predicated region
  $region10: #{tpu_custom_call.1} parent=0 // pred_check
    _
  $region11: #{tpu_custom_call.1} parent=0 // pred_check_branch
    %17 = sbr.rel (0) target = $region13
  $region12: #{tpu_custom_call.1} parent=0 // pred_region
    _
  $region13: #{tpu_custom_call.1} parent=0 // pred_fallthru
    _
  // Predicated region
  $region14: #{tpu_custom_call.1} parent=0 // pred_check
    _
  $region15: #{tpu_custom_call.1} parent=0 // pred_check_branch
    %19 = sbr.rel (0) target = $region17
  $region16: #{tpu_custom_call.1} parent=0 // pred_region
    _
  $region17: #{tpu_custom_call.1} parent=0 // pred_fallthru
    _
  // Predicated region
  $region18: #{tpu_custom_call.1} parent=0 // pred_check
    _
  $region19: #{tpu_custom_call.1} parent=0 // pred_check_branch
    %21 = sbr.rel (0) target = $region21
  $region20: #{tpu_custom_call.1} parent=0 // pred_region
    _
  $region21: #{tpu_custom_call.1} parent=0 // pred_fallthru
    _
  %v22 = vld [vmem:[%s0] sm:$0xff]
  %v23 = vld [vmem:[%s0 + $0x8] sm:$0xff]
  %v24 = vld [vmem:[%s0 + $0x10] sm:$0xff]
  %v25 = vld [vmem:[%s0 + $0x18] sm:$0xff]
  %v26 = vld [vmem:[%s0 + $0x20] sm:$0xff]
  %v27 = vld [vmem:[%s0 + $0x28] sm:$0xff]
  %v28 = vld [vmem:[%s0 + $0x30] sm:$0xff]
  %v29 = vld [vmem:[%s0 + $0x38] sm:$0xff]
  %v30 = vld [vmem:[%s0 + $0x40] sm:$0xff]
  %v31 = vld [vmem:[%s0 + $0x48] sm:$0xff]
  %v32 = vld [vmem:[%s0 + $0x50] sm:$0xff]
  %v33 = vld [vmem:[%s0 + $0x58] sm:$0xff]
  %v34 = vld [vmem:[%s0 + $0x60] sm:$0xff]
  %v35 = vld [vmem:[%s0 + $0x68] sm:$0xff]
  %v36 = vld [vmem:[%s0 + $0x70] sm:$0xff]
  %v37 = vld [vmem:[%s0 + $0x78] sm:$0xff]
  %v38 = vld [vmem:[%s0 + $0x80] sm:$0xff]
  %v39 = vld [vmem:[%s0 + $0x88] sm:$0xff]
  %v40 = vld [vmem:[%s0 + $0x90] sm:$0xff]
  %v41 = vld [vmem:[%s0 + $0x98] sm:$0xff]
  %v42 = vld [vmem:[%s0 + $0xa0] sm:$0xff]
  %v43 = vld [vmem:[%s0 + $0xa8] sm:$0xff]
  %v44 = vld [vmem:[%s0 + $0xb0] sm:$0xff]
  %v45 = vld [vmem:[%s0 + $0xb8] sm:$0xff]
  %v46 = vld [vmem:[%s0 + $0xc0] sm:$0xff]
  %v47 = vld [vmem:[%s0 + $0xc8] sm:$0xff]
  %v48 = vld [vmem:[%s0 + $0xd0] sm:$0xff]
  %v49 = vld [vmem:[%s0 + $0xd8] sm:$0xff]
  %v50 = vld [vmem:[%s0 + $0xe0] sm:$0xff]
  %v51 = vld [vmem:[%s0 + $0xe8] sm:$0xff]
  %v52 = vld [vmem:[%s0 + $0xf0] sm:$0xff]
  %v53 = vld [vmem:[%s0 + $0xf8] sm:$0xff]
  %v54 = vld [vmem:[%s0 + $0x100] sm:$0xff]
  %v55 = vld [vmem:[%s0 + $0x108] sm:$0xff]
  %v56 = vld [vmem:[%s0 + $0x110] sm:$0xff]
  %v57 = vld [vmem:[%s0 + $0x118] sm:$0xff]
  %v58 = vld [vmem:[%s0 + $0x120] sm:$0xff]
  %v59 = vld [vmem:[%s0 + $0x128] sm:$0xff]
  %v60 = vld [vmem:[%s0 + $0x130] sm:$0xff]
  %v61 = vld [vmem:[%s0 + $0x138] sm:$0xff]
  %v62 = vld [vmem:[%s0 + $0x140] sm:$0xff]
  %v63 = vld [vmem:[%s0 + $0x148] sm:$0xff]
  %v64 = vld [vmem:[%s0 + $0x150] sm:$0xff]
  %v65 = vld [vmem:[%s0 + $0x158] sm:$0xff]
  %v66 = vld [vmem:[%s0 + $0x160] sm:$0xff]
  %v67 = vld [vmem:[%s0 + $0x168] sm:$0xff]
  %v68 = vld [vmem:[%s0 + $0x170] sm:$0xff]
  %v69 = vld [vmem:[%s0 + $0x178] sm:$0xff]
  %v70 = vld [vmem:[%s0 + $0x180] sm:$0xff]
  %v71 = vld [vmem:[%s0 + $0x188] sm:$0xff]
  %v72 = vld [vmem:[%s0 + $0x190] sm:$0xff]
  %v73 = vld [vmem:[%s0 + $0x198] sm:$0xff]
  %v74 = vld [vmem:[%s0 + $0x1a0] sm:$0xff]
  %v75 = vld [vmem:[%s0 + $0x1a8] sm:$0xff]
  %v76 = vld [vmem:[%s0 + $0x1b0] sm:$0xff]
  %v77 = vld [vmem:[%s0 + $0x1b8] sm:$0xff]
  %v78 = vld [vmem:[%s0 + $0x1c0] sm:$0xff]
  %v79 = vld [vmem:[%s0 + $0x1c8] sm:$0xff]
  %v80 = vld [vmem:[%s0 + $0x1d0] sm:$0xff]
  %v81 = vld [vmem:[%s0 + $0x1d8] sm:$0xff]
  %v82 = vld [vmem:[%s1] sm:$0xff]
  %v83 = vld [vmem:[%s1 + $0x8] sm:$0x1]
  %v84 = vld [vmem:[%s2] sm:$0x1]
  %v86 = vlaneseq
  %v87 = vshrl.u32 %v86, 7
  %v88 = vsub.s32 0, %v87
  %v89 = vrot.slane %v84, %v88
  %vm91 = vcmask 72704
  %v93 = vsel %vm91, %v22, 0
  %v96 = vsel %vm91, %v23, 0
  %v99 = vsel %vm91, %v24, 0
  %v102 = vsel %vm91, %v25, 0
  %v105 = vsel %vm91, %v26, 0
  %v108 = vsel %vm91, %v27, 0
  %v111 = vsel %vm91, %v28, 0
  %v114 = vsel %vm91, %v29, 0
  %v117 = vsel %vm91, %v30, 0
  %v120 = vsel %vm91, %v31, 0
  %v123 = vsel %vm91, %v32, 0
  %v126 = vsel %vm91, %v33, 0
  %v129 = vsel %vm91, %v34, 0
  %v132 = vsel %vm91, %v35, 0
  %v135 = vsel %vm91, %v36, 0
  %v138 = vsel %vm91, %v37, 0
  %v141 = vsel %vm91, %v38, 0
  %v144 = vsel %vm91, %v39, 0
  %v147 = vsel %vm91, %v40, 0
  %v150 = vsel %vm91, %v41, 0
  %v153 = vsel %vm91, %v42, 0
  %v156 = vsel %vm91, %v43, 0
  %v159 = vsel %vm91, %v44, 0
  %v162 = vsel %vm91, %v45, 0
  %v165 = vsel %vm91, %v46, 0
  %v168 = vsel %vm91, %v47, 0
  %v171 = vsel %vm91, %v48, 0
  %v174 = vsel %vm91, %v49, 0
  %v177 = vsel %vm91, %v50, 0
  %v180 = vsel %vm91, %v51, 0
  %v183 = vsel %vm91, %v52, 0
  %v186 = vsel %vm91, %v53, 0
  %v189 = vsel %vm91, %v54, 0
  %v192 = vsel %vm91, %v55, 0
  %v195 = vsel %vm91, %v56, 0
  %v198 = vsel %vm91, %v57, 0
  %v201 = vsel %vm91, %v58, 0
  %v204 = vsel %vm91, %v59, 0
  %v207 = vsel %vm91, %v60, 0
  %v210 = vsel %vm91, %v61, 0
  %v213 = vsel %vm91, %v62, 0
  %v216 = vsel %vm91, %v63, 0
  %v219 = vsel %vm91, %v64, 0
  %v222 = vsel %vm91, %v65, 0
  %v225 = vsel %vm91, %v66, 0
  %v228 = vsel %vm91, %v67, 0
  %v231 = vsel %vm91, %v68, 0
  %v234 = vsel %vm91, %v69, 0
  %v237 = vsel %vm91, %v70, 0
  %v240 = vsel %vm91, %v71, 0
  %v243 = vsel %vm91, %v72, 0
  %v246 = vsel %vm91, %v73, 0
  %v249 = vsel %vm91, %v74, 0
  %v252 = vsel %vm91, %v75, 0
  %v255 = vsel %vm91, %v76, 0
  %v258 = vsel %vm91, %v77, 0
  %v261 = vsel %vm91, %v78, 0
  %v264 = vsel %vm91, %v79, 0
  %v267 = vsel %vm91, %v80, 0
  %v270 = vsel %vm91, %v81, 0
  %vm272 = vcmask 1040384
  %v274 = vsel %vm272, %v83, 0
  %276 = vmatprep.subr.mxu0 0.0
  %277 = vmatpush1.msra.mxu0 0.0
  %278 = vmatprep.subr.mxu0 0.0
  %279 = vmatpush1.msra.mxu0 0.0
  %280 = vmatprep.subr.mxu0 0.0
  %281 = vmatpush1.msra.mxu0 0.0
  %282 = vmatprep.subr.mxu0 0.0
  %283 = vmatpush1.msra.mxu0 0.0
  %284 = vmatprep.subr.mxu0 0.0
  %285 = vmatpush1.msra.mxu0 0.0
  %286 = vmatprep.subr.mxu0 0.0
  %287 = vmatpush1.msra.mxu0 0.0
  %288 = vmatprep.subr.mxu0 0.0
  %289 = vmatpush1.msra.mxu0 0.0
  %290 = vmatprep.subr.mxu0 0.0
  %291 = vmatpush1.msra.mxu0 0.0
  %292 = vmatprep.subr.mxu0 0.0
  %293 = vmatpush1.msra.mxu0 0.0
  %294 = vmatprep.subr.mxu0 0.0
  %295 = vmatpush1.msra.mxu0 0.0
  %296 = vmatprep.subr.mxu0 0.0
  %297 = vmatpush1.msra.mxu0 0.0
  %298 = vmatprep.subr.mxu0 0.0
  %299 = vmatpush1.msra.mxu0 0.0
  %300 = vmatprep.subr.mxu0 0.0
  %301 = vmatpush1.msra.mxu0 0.0
  %302 = vmatprep.subr.mxu0 0.0
  %303 = vmatpush1.msra.mxu0 0.0
  %304 = vmatprep.subr.mxu0 0.0
  %305 = vmatpush1.msra.mxu0 %v274
  %306 = vmatprep.subr.mxu0 0.0
  %307 = vmatpush1.msra.mxu0 %v82
  %308 = vmatprep.subr.mxu0 0.0
  %309 = vmatpush2.msra.mxu0 0.0
  %310 = vmatprep.subr.mxu0 0.0
  %311 = vmatpush2.msra.mxu0 0.0
  %312 = vmatprep.subr.mxu0 0.0
  %313 = vmatpush2.msra.mxu0 0.0
  %314 = vmatprep.subr.mxu0 0.0
  %315 = vmatpush2.msra.mxu0 0.0
  %316 = vmatprep.subr.mxu0 0.0
  %317 = vmatpush2.msra.mxu0 0.0
  %318 = vmatprep.subr.mxu0 0.0
  %319 = vmatpush2.msra.mxu0 0.0
  %320 = vmatprep.subr.mxu0 0.0
  %321 = vmatpush2.msra.mxu0 0.0
  %322 = vmatprep.subr.mxu0 0.0
  %323 = vmatpush2.msra.mxu0 0.0
  %324 = vmatprep.subr.mxu0 0.0
  %325 = vmatpush2.msra.mxu0 0.0
  %326 = vmatprep.subr.mxu0 0.0
  %327 = vmatpush2.msra.mxu0 0.0
  %328 = vmatprep.subr.mxu0 0.0
  %329 = vmatpush2.msra.mxu0 0.0
  %330 = vmatprep.subr.mxu0 0.0
  %331 = vmatpush2.msra.mxu0 0.0
  %332 = vmatprep.subr.mxu0 0.0
  %333 = vmatpush2.msra.mxu0 0.0
  %334 = vmatprep.subr.mxu0 0.0
  %335 = vmatpush2.msra.mxu0 0.0
  %336 = vmatprep.subr.mxu0 0.0
  %337 = vmatpush2.msra.mxu0 0.0
  %338 = vmatprep.subr.mxu0 0.0
  %339 = vmatpush2.msra.mxu0 0.0
  %340 = vmatprep.mubr.f32.mxu0 0.0
  %341 = vmatmul.mubr.f32.gmra.mxu0 %v93
  %v342 = vpop.f32.mrf.mxu0
  %v343 = vadd.f32 %v89, %v342
  %v344 = vpop.f32.mrf.mxu0
  %345 = vmatprep.mubr.f32.mxu0 0.0
  %346 = vmatmul.mubr.f32.gmra.mxu0 %v96
  %v347 = vpop.f32.mrf.mxu0
  %v348 = vadd.f32 %v89, %v347
  %v349 = vpop.f32.mrf.mxu0
  %350 = vmatprep.mubr.f32.mxu0 0.0
  %351 = vmatmul.mubr.f32.gmra.mxu0 %v99
  %v352 = vpop.f32.mrf.mxu0
  %v353 = vadd.f32 %v89, %v352
  %v354 = vpop.f32.mrf.mxu0
  %355 = vmatprep.mubr.f32.mxu0 0.0
  %356 = vmatmul.mubr.f32.gmra.mxu0 %v102
  %v357 = vpop.f32.mrf.mxu0
  %v358 = vadd.f32 %v89, %v357
  %v359 = vpop.f32.mrf.mxu0
  %360 = vmatprep.mubr.f32.mxu0 0.0
  %361 = vmatmul.mubr.f32.gmra.mxu0 %v105
  %v362 = vpop.f32.mrf.mxu0
  %v363 = vadd.f32 %v89, %v362
  %v364 = vpop.f32.mrf.mxu0
  %365 = vmatprep.mubr.f32.mxu0 0.0
  %366 = vmatmul.mubr.f32.gmra.mxu0 %v108
  %v367 = vpop.f32.mrf.mxu0
  %v368 = vadd.f32 %v89, %v367
  %v369 = vpop.f32.mrf.mxu0
  %370 = vmatprep.mubr.f32.mxu0 0.0
  %371 = vmatmul.mubr.f32.gmra.mxu0 %v111
  %v372 = vpop.f32.mrf.mxu0
  %v373 = vadd.f32 %v89, %v372
  %v374 = vpop.f32.mrf.mxu0
  %375 = vmatprep.mubr.f32.mxu0 0.0
  %376 = vmatmul.mubr.f32.gmra.mxu0 %v114
  %v377 = vpop.f32.mrf.mxu0
  %v378 = vadd.f32 %v89, %v377
  %v379 = vpop.f32.mrf.mxu0
  %380 = vmatprep.mubr.f32.mxu0 0.0
  %381 = vmatmul.mubr.f32.gmra.mxu0 %v117
  %v382 = vpop.f32.mrf.mxu0
  %v383 = vadd.f32 %v89, %v382
  %v384 = vpop.f32.mrf.mxu0
  %385 = vmatprep.mubr.f32.mxu0 0.0
  %386 = vmatmul.mubr.f32.gmra.mxu0 %v120
  %v387 = vpop.f32.mrf.mxu0
  %v388 = vadd.f32 %v89, %v387
  %v389 = vpop.f32.mrf.mxu0
  %390 = vmatprep.mubr.f32.mxu0 0.0
  %391 = vmatmul.mubr.f32.gmra.mxu0 %v123
  %v392 = vpop.f32.mrf.mxu0
  %v393 = vadd.f32 %v89, %v392
  %v394 = vpop.f32.mrf.mxu0
  %395 = vmatprep.mubr.f32.mxu0 0.0
  %396 = vmatmul.mubr.f32.gmra.mxu0 %v126
  %v397 = vpop.f32.mrf.mxu0
  %v398 = vadd.f32 %v89, %v397
  %v399 = vpop.f32.mrf.mxu0
  %400 = vmatprep.mubr.f32.mxu0 0.0
  %401 = vmatmul.mubr.f32.gmra.mxu0 %v129
  %v402 = vpop.f32.mrf.mxu0
  %v403 = vadd.f32 %v89, %v402
  %v404 = vpop.f32.mrf.mxu0
  %405 = vmatprep.mubr.f32.mxu0 0.0
  %406 = vmatmul.mubr.f32.gmra.mxu0 %v132
  %v407 = vpop.f32.mrf.mxu0
  %v408 = vadd.f32 %v89, %v407
  %v409 = vpop.f32.mrf.mxu0
  %410 = vmatprep.mubr.f32.mxu0 0.0
  %411 = vmatmul.mubr.f32.gmra.mxu0 %v135
  %v412 = vpop.f32.mrf.mxu0
  %v413 = vadd.f32 %v89, %v412
  %v414 = vpop.f32.mrf.mxu0
  %415 = vmatprep.mubr.f32.mxu0 0.0
  %416 = vmatmul.mubr.f32.gmra.mxu0 %v138
  %v417 = vpop.f32.mrf.mxu0
  %v418 = vadd.f32 %v89, %v417
  %v419 = vpop.f32.mrf.mxu0
  %420 = vmatprep.mubr.f32.mxu0 0.0
  %421 = vmatmul.mubr.f32.gmra.mxu0 %v141
  %v422 = vpop.f32.mrf.mxu0
  %v423 = vadd.f32 %v89, %v422
  %v424 = vpop.f32.mrf.mxu0
  %425 = vmatprep.mubr.f32.mxu0 0.0
  %426 = vmatmul.mubr.f32.gmra.mxu0 %v144
  %v427 = vpop.f32.mrf.mxu0
  %v428 = vadd.f32 %v89, %v427
  %v429 = vpop.f32.mrf.mxu0
  %430 = vmatprep.mubr.f32.mxu0 0.0
  %431 = vmatmul.mubr.f32.gmra.mxu0 %v147
  %v432 = vpop.f32.mrf.mxu0
  %v433 = vadd.f32 %v89, %v432
  %v434 = vpop.f32.mrf.mxu0
  %435 = vmatprep.mubr.f32.mxu0 0.0
  %436 = vmatmul.mubr.f32.gmra.mxu0 %v150
  %v437 = vpop.f32.mrf.mxu0
  %v438 = vadd.f32 %v89, %v437
  %v439 = vpop.f32.mrf.mxu0
  %440 = vmatprep.mubr.f32.mxu0 0.0
  %441 = vmatmul.mubr.f32.gmra.mxu0 %v153
  %v442 = vpop.f32.mrf.mxu0
  %v443 = vadd.f32 %v89, %v442
  %v444 = vpop.f32.mrf.mxu0
  %445 = vmatprep.mubr.f32.mxu0 0.0
  %446 = vmatmul.mubr.f32.gmra.mxu0 %v156
  %v447 = vpop.f32.mrf.mxu0
  %v448 = vadd.f32 %v89, %v447
  %v449 = vpop.f32.mrf.mxu0
  %450 = vmatprep.mubr.f32.mxu0 0.0
  %451 = vmatmul.mubr.f32.gmra.mxu0 %v159
  %v452 = vpop.f32.mrf.mxu0
  %v453 = vadd.f32 %v89, %v452
  %v454 = vpop.f32.mrf.mxu0
  %455 = vmatprep.mubr.f32.mxu0 0.0
  %456 = vmatmul.mubr.f32.gmra.mxu0 %v162
  %v457 = vpop.f32.mrf.mxu0
  %v458 = vadd.f32 %v89, %v457
  %v459 = vpop.f32.mrf.mxu0
  %460 = vmatprep.mubr.f32.mxu0 0.0
  %461 = vmatmul.mubr.f32.gmra.mxu0 %v165
  %v462 = vpop.f32.mrf.mxu0
  %v463 = vadd.f32 %v89, %v462
  %v464 = vpop.f32.mrf.mxu0
  %465 = vmatprep.mubr.f32.mxu0 0.0
  %466 = vmatmul.mubr.f32.gmra.mxu0 %v168
  %v467 = vpop.f32.mrf.mxu0
  %v468 = vadd.f32 %v89, %v467
  %v469 = vpop.f32.mrf.mxu0
  %470 = vmatprep.mubr.f32.mxu0 0.0
  %471 = vmatmul.mubr.f32.gmra.mxu0 %v171
  %v472 = vpop.f32.mrf.mxu0
  %v473 = vadd.f32 %v89, %v472
  %v474 = vpop.f32.mrf.mxu0
  %475 = vmatprep.mubr.f32.mxu0 0.0
  %476 = vmatmul.mubr.f32.gmra.mxu0 %v174
  %v477 = vpop.f32.mrf.mxu0
  %v478 = vadd.f32 %v89, %v477
  %v479 = vpop.f32.mrf.mxu0
  %480 = vmatprep.mubr.f32.mxu0 0.0
  %481 = vmatmul.mubr.f32.gmra.mxu0 %v177
  %v482 = vpop.f32.mrf.mxu0
  %v483 = vadd.f32 %v89, %v482
  %v484 = vpop.f32.mrf.mxu0
  %485 = vmatprep.mubr.f32.mxu0 0.0
  %486 = vmatmul.mubr.f32.gmra.mxu0 %v180
  %v487 = vpop.f32.mrf.mxu0
  %v488 = vadd.f32 %v89, %v487
  %v489 = vpop.f32.mrf.mxu0
  %490 = vmatprep.mubr.f32.mxu0 0.0
  %491 = vmatmul.mubr.f32.gmra.mxu0 %v183
  %v492 = vpop.f32.mrf.mxu0
  %v493 = vadd.f32 %v89, %v492
  %v494 = vpop.f32.mrf.mxu0
  %495 = vmatprep.mubr.f32.mxu0 0.0
  %496 = vmatmul.mubr.f32.gmra.mxu0 %v186
  %v497 = vpop.f32.mrf.mxu0
  %v498 = vadd.f32 %v89, %v497
  %v499 = vpop.f32.mrf.mxu0
  %500 = vmatprep.mubr.f32.mxu0 0.0
  %501 = vmatmul.mubr.f32.gmra.mxu0 %v189
  %v502 = vpop.f32.mrf.mxu0
  %v503 = vadd.f32 %v89, %v502
  %v504 = vpop.f32.mrf.mxu0
  %505 = vmatprep.mubr.f32.mxu0 0.0
  %506 = vmatmul.mubr.f32.gmra.mxu0 %v192
  %v507 = vpop.f32.mrf.mxu0
  %v508 = vadd.f32 %v89, %v507
  %v509 = vpop.f32.mrf.mxu0
  %510 = vmatprep.mubr.f32.mxu0 0.0
  %511 = vmatmul.mubr.f32.gmra.mxu0 %v195
  %v512 = vpop.f32.mrf.mxu0
  %v513 = vadd.f32 %v89, %v512
  %v514 = vpop.f32.mrf.mxu0
  %515 = vmatprep.mubr.f32.mxu0 0.0
  %516 = vmatmul.mubr.f32.gmra.mxu0 %v198
  %v517 = vpop.f32.mrf.mxu0
  %v518 = vadd.f32 %v89, %v517
  %v519 = vpop.f32.mrf.mxu0
  %520 = vmatprep.mubr.f32.mxu0 0.0
  %521 = vmatmul.mubr.f32.gmra.mxu0 %v201
  %v522 = vpop.f32.mrf.mxu0
  %v523 = vadd.f32 %v89, %v522
  %v524 = vpop.f32.mrf.mxu0
  %525 = vmatprep.mubr.f32.mxu0 0.0
  %526 = vmatmul.mubr.f32.gmra.mxu0 %v204
  %v527 = vpop.f32.mrf.mxu0
  %v528 = vadd.f32 %v89, %v527
  %v529 = vpop.f32.mrf.mxu0
  %530 = vmatprep.mubr.f32.mxu0 0.0
  %531 = vmatmul.mubr.f32.gmra.mxu0 %v207
  %v532 = vpop.f32.mrf.mxu0
  %v533 = vadd.f32 %v89, %v532
  %v534 = vpop.f32.mrf.mxu0
  %535 = vmatprep.mubr.f32.mxu0 0.0
  %536 = vmatmul.mubr.f32.gmra.mxu0 %v210
  %v537 = vpop.f32.mrf.mxu0
  %v538 = vadd.f32 %v89, %v537
  %v539 = vpop.f32.mrf.mxu0
  %540 = vmatprep.mubr.f32.mxu0 0.0
  %541 = vmatmul.mubr.f32.gmra.mxu0 %v213
  %v542 = vpop.f32.mrf.mxu0
  %v543 = vadd.f32 %v89, %v542
  %v544 = vpop.f32.mrf.mxu0
  %545 = vmatprep.mubr.f32.mxu0 0.0
  %546 = vmatmul.mubr.f32.gmra.mxu0 %v216
  %v547 = vpop.f32.mrf.mxu0
  %v548 = vadd.f32 %v89, %v547
  %v549 = vpop.f32.mrf.mxu0
  %550 = vmatprep.mubr.f32.mxu0 0.0
  %551 = vmatmul.mubr.f32.gmra.mxu0 %v219
  %v552 = vpop.f32.mrf.mxu0
  %v553 = vadd.f32 %v89, %v552
  %v554 = vpop.f32.mrf.mxu0
  %555 = vmatprep.mubr.f32.mxu0 0.0
  %556 = vmatmul.mubr.f32.gmra.mxu0 %v222
  %v557 = vpop.f32.mrf.mxu0
  %v558 = vadd.f32 %v89, %v557
  %v559 = vpop.f32.mrf.mxu0
  %560 = vmatprep.mubr.f32.mxu0 0.0
  %561 = vmatmul.mubr.f32.gmra.mxu0 %v225
  %v562 = vpop.f32.mrf.mxu0
  %v563 = vadd.f32 %v89, %v562
  %v564 = vpop.f32.mrf.mxu0
  %565 = vmatprep.mubr.f32.mxu0 0.0
  %566 = vmatmul.mubr.f32.gmra.mxu0 %v228
  %v567 = vpop.f32.mrf.mxu0
  %v568 = vadd.f32 %v89, %v567
  %v569 = vpop.f32.mrf.mxu0
  %570 = vmatprep.mubr.f32.mxu0 0.0
  %571 = vmatmul.mubr.f32.gmra.mxu0 %v231
  %v572 = vpop.f32.mrf.mxu0
  %v573 = vadd.f32 %v89, %v572
  %v574 = vpop.f32.mrf.mxu0
  %575 = vmatprep.mubr.f32.mxu0 0.0
  %576 = vmatmul.mubr.f32.gmra.mxu0 %v234
  %v577 = vpop.f32.mrf.mxu0
  %v578 = vadd.f32 %v89, %v577
  %v579 = vpop.f32.mrf.mxu0
  %580 = vmatprep.mubr.f32.mxu0 0.0
  %581 = vmatmul.mubr.f32.gmra.mxu0 %v237
  %v582 = vpop.f32.mrf.mxu0
  %v583 = vadd.f32 %v89, %v582
  %v584 = vpop.f32.mrf.mxu0
  %585 = vmatprep.mubr.f32.mxu0 0.0
  %586 = vmatmul.mubr.f32.gmra.mxu0 %v240
  %v587 = vpop.f32.mrf.mxu0
  %v588 = vadd.f32 %v89, %v587
  %v589 = vpop.f32.mrf.mxu0
  %590 = vmatprep.mubr.f32.mxu0 0.0
  %591 = vmatmul.mubr.f32.gmra.mxu0 %v243
  %v592 = vpop.f32.mrf.mxu0
  %v593 = vadd.f32 %v89, %v592
  %v594 = vpop.f32.mrf.mxu0
  %595 = vmatprep.mubr.f32.mxu0 0.0
  %596 = vmatmul.mubr.f32.gmra.mxu0 %v246
  %v597 = vpop.f32.mrf.mxu0
  %v598 = vadd.f32 %v89, %v597
  %v599 = vpop.f32.mrf.mxu0
  %600 = vmatprep.mubr.f32.mxu0 0.0
  %601 = vmatmul.mubr.f32.gmra.mxu0 %v249
  %v602 = vpop.f32.mrf.mxu0
  %v603 = vadd.f32 %v89, %v602
  %v604 = vpop.f32.mrf.mxu0
  %605 = vmatprep.mubr.f32.mxu0 0.0
  %606 = vmatmul.mubr.f32.gmra.mxu0 %v252
  %v607 = vpop.f32.mrf.mxu0
  %v608 = vadd.f32 %v89, %v607
  %v609 = vpop.f32.mrf.mxu0
  %610 = vmatprep.mubr.f32.mxu0 0.0
  %611 = vmatmul.mubr.f32.gmra.mxu0 %v255
  %v612 = vpop.f32.mrf.mxu0
  %v613 = vadd.f32 %v89, %v612
  %v614 = vpop.f32.mrf.mxu0
  %615 = vmatprep.mubr.f32.mxu0 0.0
  %616 = vmatmul.mubr.f32.gmra.mxu0 %v258
  %v617 = vpop.f32.mrf.mxu0
  %v618 = vadd.f32 %v89, %v617
  %v619 = vpop.f32.mrf.mxu0
  %620 = vmatprep.mubr.f32.mxu0 0.0
  %621 = vmatmul.mubr.f32.gmra.mxu0 %v261
  %v622 = vpop.f32.mrf.mxu0
  %v623 = vadd.f32 %v89, %v622
  %v624 = vpop.f32.mrf.mxu0
  %625 = vmatprep.mubr.f32.mxu0 0.0
  %626 = vmatmul.mubr.f32.gmra.mxu0 %v264
  %v627 = vpop.f32.mrf.mxu0
  %v628 = vadd.f32 %v89, %v627
  %v629 = vpop.f32.mrf.mxu0
  %630 = vmatprep.mubr.f32.mxu0 0.0
  %631 = vmatmul.mubr.f32.gmra.mxu0 %v267
  %v632 = vpop.f32.mrf.mxu0
  %v633 = vadd.f32 %v89, %v632
  %v634 = vpop.f32.mrf.mxu0
  %635 = vmatprep.mubr.f32.mxu0 0.0
  %636 = vmatmul.mubr.f32.gmra.mxu0 %v270
  %v637 = vpop.f32.mrf.mxu0
  %v638 = vadd.f32 %v89, %v637
  %v639 = vpop.f32.mrf.mxu0
  %640 = vdwg.mxu0
  %v641 = vmax.f32 %v343, 0.0
  %v642 = vmax.f32 %v348, 0.0
  %v643 = vmax.f32 %v353, 0.0
  %v644 = vmax.f32 %v358, 0.0
  %v645 = vmax.f32 %v363, 0.0
  %v646 = vmax.f32 %v368, 0.0
  %v647 = vmax.f32 %v373, 0.0
  %v648 = vmax.f32 %v378, 0.0
  %v649 = vmax.f32 %v383, 0.0
  %v650 = vmax.f32 %v388, 0.0
  %v651 = vmax.f32 %v393, 0.0
  %v652 = vmax.f32 %v398, 0.0
  %v653 = vmax.f32 %v403, 0.0
  %v654 = vmax.f32 %v408, 0.0
  %v655 = vmax.f32 %v413, 0.0
  %v656 = vmax.f32 %v418, 0.0
  %v657 = vmax.f32 %v423, 0.0
  %v658 = vmax.f32 %v428, 0.0
  %v659 = vmax.f32 %v433, 0.0
  %v660 = vmax.f32 %v438, 0.0
  %v661 = vmax.f32 %v443, 0.0
  %v662 = vmax.f32 %v448, 0.0
  %v663 = vmax.f32 %v453, 0.0
  %v664 = vmax.f32 %v458, 0.0
  %v665 = vmax.f32 %v463, 0.0
  %v666 = vmax.f32 %v468, 0.0
  %v667 = vmax.f32 %v473, 0.0
  %v668 = vmax.f32 %v478, 0.0
  %v669 = vmax.f32 %v483, 0.0
  %v670 = vmax.f32 %v488, 0.0
  %v671 = vmax.f32 %v493, 0.0
  %v672 = vmax.f32 %v498, 0.0
  %v673 = vmax.f32 %v503, 0.0
  %v674 = vmax.f32 %v508, 0.0
  %v675 = vmax.f32 %v513, 0.0
  %v676 = vmax.f32 %v518, 0.0
  %v677 = vmax.f32 %v523, 0.0
  %v678 = vmax.f32 %v528, 0.0
  %v679 = vmax.f32 %v533, 0.0
  %v680 = vmax.f32 %v538, 0.0
  %v681 = vmax.f32 %v543, 0.0
  %v682 = vmax.f32 %v548, 0.0
  %v683 = vmax.f32 %v553, 0.0
  %v684 = vmax.f32 %v558, 0.0
  %v685 = vmax.f32 %v563, 0.0
  %v686 = vmax.f32 %v568, 0.0
  %v687 = vmax.f32 %v573, 0.0
  %v688 = vmax.f32 %v578, 0.0
  %v689 = vmax.f32 %v583, 0.0
  %v690 = vmax.f32 %v588, 0.0
  %v691 = vmax.f32 %v593, 0.0
  %v692 = vmax.f32 %v598, 0.0
  %v693 = vmax.f32 %v603, 0.0
  %v694 = vmax.f32 %v608, 0.0
  %v695 = vmax.f32 %v613, 0.0
  %v696 = vmax.f32 %v618, 0.0
  %v697 = vmax.f32 %v623, 0.0
  %v698 = vmax.f32 %v628, 0.0
  %v699 = vmax.f32 %v633, 0.0
  %v700 = vmax.f32 %v638, 0.0
  %vm701 = vcmask 261120
  %702 = vst.msk [vmem:[%s5] sm:$0xff] %vm701, %v641
  %703 = vst.msk [vmem:[%s5 + $0x8] sm:$0xff] %vm701, %v642
  %704 = vst.msk [vmem:[%s5 + $0x10] sm:$0xff] %vm701, %v643
  %705 = vst.msk [vmem:[%s5 + $0x18] sm:$0xff] %vm701, %v644
  %706 = vst.msk [vmem:[%s5 + $0x20] sm:$0xff] %vm701, %v645
  %707 = vst.msk [vmem:[%s5 + $0x28] sm:$0xff] %vm701, %v646
  %708 = vst.msk [vmem:[%s5 + $0x30] sm:$0xff] %vm701, %v647
  %709 = vst.msk [vmem:[%s5 + $0x38] sm:$0xff] %vm701, %v648
  %710 = vst.msk [vmem:[%s5 + $0x40] sm:$0xff] %vm701, %v649
  %711 = vst.msk [vmem:[%s5 + $0x48] sm:$0xff] %vm701, %v650
  %712 = vst.msk [vmem:[%s5 + $0x50] sm:$0xff] %vm701, %v651
  %713 = vst.msk [vmem:[%s5 + $0x58] sm:$0xff] %vm701, %v652
  %714 = vst.msk [vmem:[%s5 + $0x60] sm:$0xff] %vm701, %v653
  %715 = vst.msk [vmem:[%s5 + $0x68] sm:$0xff] %vm701, %v654
  %716 = vst.msk [vmem:[%s5 + $0x70] sm:$0xff] %vm701, %v655
  %717 = vst.msk [vmem:[%s5 + $0x78] sm:$0xff] %vm701, %v656
  %718 = vst.msk [vmem:[%s5 + $0x80] sm:$0xff] %vm701, %v657
  %719 = vst.msk [vmem:[%s5 + $0x88] sm:$0xff] %vm701, %v658
  %720 = vst.msk [vmem:[%s5 + $0x90] sm:$0xff] %vm701, %v659
  %721 = vst.msk [vmem:[%s5 + $0x98] sm:$0xff] %vm701, %v660
  %722 = vst.msk [vmem:[%s5 + $0xa0] sm:$0xff] %vm701, %v661
  %723 = vst.msk [vmem:[%s5 + $0xa8] sm:$0xff] %vm701, %v662
  %724 = vst.msk [vmem:[%s5 + $0xb0] sm:$0xff] %vm701, %v663
  %725 = vst.msk [vmem:[%s5 + $0xb8] sm:$0xff] %vm701, %v664
  %726 = vst.msk [vmem:[%s5 + $0xc0] sm:$0xff] %vm701, %v665
  %727 = vst.msk [vmem:[%s5 + $0xc8] sm:$0xff] %vm701, %v666
  %728 = vst.msk [vmem:[%s5 + $0xd0] sm:$0xff] %vm701, %v667
  %729 = vst.msk [vmem:[%s5 + $0xd8] sm:$0xff] %vm701, %v668
  %730 = vst.msk [vmem:[%s5 + $0xe0] sm:$0xff] %vm701, %v669
  %731 = vst.msk [vmem:[%s5 + $0xe8] sm:$0xff] %vm701, %v670
  %732 = vst.msk [vmem:[%s5 + $0xf0] sm:$0xff] %vm701, %v671
  %733 = vst.msk [vmem:[%s5 + $0xf8] sm:$0xff] %vm701, %v672
  %734 = vst.msk [vmem:[%s5 + $0x100] sm:$0xff] %vm701, %v673
  %735 = vst.msk [vmem:[%s5 + $0x108] sm:$0xff] %vm701, %v674
  %736 = vst.msk [vmem:[%s5 + $0x110] sm:$0xff] %vm701, %v675
  %737 = vst.msk [vmem:[%s5 + $0x118] sm:$0xff] %vm701, %v676
  %738 = vst.msk [vmem:[%s5 + $0x120] sm:$0xff] %vm701, %v677
  %739 = vst.msk [vmem:[%s5 + $0x128] sm:$0xff] %vm701, %v678
  %740 = vst.msk [vmem:[%s5 + $0x130] sm:$0xff] %vm701, %v679
  %741 = vst.msk [vmem:[%s5 + $0x138] sm:$0xff] %vm701, %v680
  %742 = vst.msk [vmem:[%s5 + $0x140] sm:$0xff] %vm701, %v681
  %743 = vst.msk [vmem:[%s5 + $0x148] sm:$0xff] %vm701, %v682
  %744 = vst.msk [vmem:[%s5 + $0x150] sm:$0xff] %vm701, %v683
  %745 = vst.msk [vmem:[%s5 + $0x158] sm:$0xff] %vm701, %v684
  %746 = vst.msk [vmem:[%s5 + $0x160] sm:$0xff] %vm701, %v685
  %747 = vst.msk [vmem:[%s5 + $0x168] sm:$0xff] %vm701, %v686
  %748 = vst.msk [vmem:[%s5 + $0x170] sm:$0xff] %vm701, %v687
  %749 = vst.msk [vmem:[%s5 + $0x178] sm:$0xff] %vm701, %v688
  %750 = vst.msk [vmem:[%s5 + $0x180] sm:$0xff] %vm701, %v689
  %751 = vst.msk [vmem:[%s5 + $0x188] sm:$0xff] %vm701, %v690
  %752 = vst.msk [vmem:[%s5 + $0x190] sm:$0xff] %vm701, %v691
  %753 = vst.msk [vmem:[%s5 + $0x198] sm:$0xff] %vm701, %v692
  %754 = vst.msk [vmem:[%s5 + $0x1a0] sm:$0xff] %vm701, %v693
  %755 = vst.msk [vmem:[%s5 + $0x1a8] sm:$0xff] %vm701, %v694
  %756 = vst.msk [vmem:[%s5 + $0x1b0] sm:$0xff] %vm701, %v695
  %757 = vst.msk [vmem:[%s5 + $0x1b8] sm:$0xff] %vm701, %v696
  %758 = vst.msk [vmem:[%s5 + $0x1c0] sm:$0xff] %vm701, %v697
  %759 = vst.msk [vmem:[%s5 + $0x1c8] sm:$0xff] %vm701, %v698
  %760 = vst.msk [vmem:[%s5 + $0x1d0] sm:$0xff] %vm701, %v699
  %761 = vst.msk [vmem:[%s5 + $0x1d8] sm:$0xff] %vm701, %v700
  %v762 = vld [vmem:[%s3] sm:$0xff]
  %v763 = vld [vmem:[%s3 + $0x8] sm:$0x1]
  %v764 = vld [vmem:[%s4] sm:$0x1]
  %v766 = vlaneseq
  %v767 = vshrl.u32 %v766, 7
  %v768 = vsub.s32 0, %v767
  %v769 = vrot.slane %v764, %v768
  %v772 = vsel %vm272, %v763, 0
  %774 = vmatprep.subr.mxu0 0.0
  %775 = vmatpush1.msra.mxu0 0.0
  %776 = vmatprep.subr.mxu0 0.0
  %777 = vmatpush1.msra.mxu0 0.0
  %778 = vmatprep.subr.mxu0 0.0
  %779 = vmatpush1.msra.mxu0 0.0
  %780 = vmatprep.subr.mxu0 0.0
  %781 = vmatpush1.msra.mxu0 0.0
  %782 = vmatprep.subr.mxu0 0.0
  %783 = vmatpush1.msra.mxu0 0.0
  %784 = vmatprep.subr.mxu0 0.0
  %785 = vmatpush1.msra.mxu0 0.0
  %786 = vmatprep.subr.mxu0 0.0
  %787 = vmatpush1.msra.mxu0 0.0
  %788 = vmatprep.subr.mxu0 0.0
  %789 = vmatpush1.msra.mxu0 0.0
  %790 = vmatprep.subr.mxu0 0.0
  %791 = vmatpush1.msra.mxu0 0.0
  %792 = vmatprep.subr.mxu0 0.0
  %793 = vmatpush1.msra.mxu0 0.0
  %794 = vmatprep.subr.mxu0 0.0
  %795 = vmatpush1.msra.mxu0 0.0
  %796 = vmatprep.subr.mxu0 0.0
  %797 = vmatpush1.msra.mxu0 0.0
  %798 = vmatprep.subr.mxu0 0.0
  %799 = vmatpush1.msra.mxu0 0.0
  %800 = vmatprep.subr.mxu0 0.0
  %801 = vmatpush1.msra.mxu0 0.0
  %802 = vmatprep.subr.mxu0 0.0
  %803 = vmatpush1.msra.mxu0 %v772
  %804 = vmatprep.subr.mxu0 0.0
  %805 = vmatpush1.msra.mxu0 %v762
  %806 = vmatprep.subr.mxu0 0.0
  %807 = vmatpush2.msra.mxu0 0.0
  %808 = vmatprep.subr.mxu0 0.0
  %809 = vmatpush2.msra.mxu0 0.0
  %810 = vmatprep.subr.mxu0 0.0
  %811 = vmatpush2.msra.mxu0 0.0
  %812 = vmatprep.subr.mxu0 0.0
  %813 = vmatpush2.msra.mxu0 0.0
  %814 = vmatprep.subr.mxu0 0.0
  %815 = vmatpush2.msra.mxu0 0.0
  %816 = vmatprep.subr.mxu0 0.0
  %817 = vmatpush2.msra.mxu0 0.0
  %818 = vmatprep.subr.mxu0 0.0
  %819 = vmatpush2.msra.mxu0 0.0
  %820 = vmatprep.subr.mxu0 0.0
  %821 = vmatpush2.msra.mxu0 0.0
  %822 = vmatprep.subr.mxu0 0.0
  %823 = vmatpush2.msra.mxu0 0.0
  %824 = vmatprep.subr.mxu0 0.0
  %825 = vmatpush2.msra.mxu0 0.0
  %826 = vmatprep.subr.mxu0 0.0
  %827 = vmatpush2.msra.mxu0 0.0
  %828 = vmatprep.subr.mxu0 0.0
  %829 = vmatpush2.msra.mxu0 0.0
  %830 = vmatprep.subr.mxu0 0.0
  %831 = vmatpush2.msra.mxu0 0.0
  %832 = vmatprep.subr.mxu0 0.0
  %833 = vmatpush2.msra.mxu0 0.0
  %834 = vmatprep.subr.mxu0 0.0
  %835 = vmatpush2.msra.mxu0 0.0
  %836 = vmatprep.subr.mxu0 0.0
  %837 = vmatpush2.msra.mxu0 0.0
  %838 = vmatprep.mubr.f32.mxu0 0.0
  %839 = vmatmul.mubr.f32.gmra.mxu0 %v93
  %v840 = vpop.f32.mrf.mxu0
  %v841 = vadd.f32 %v769, %v840
  %v842 = vpop.f32.mrf.mxu0
  %843 = vmatprep.mubr.f32.mxu0 0.0
  %844 = vmatmul.mubr.f32.gmra.mxu0 %v96
  %v845 = vpop.f32.mrf.mxu0
  %v846 = vadd.f32 %v769, %v845
  %v847 = vpop.f32.mrf.mxu0
  %848 = vmatprep.mubr.f32.mxu0 0.0
  %849 = vmatmul.mubr.f32.gmra.mxu0 %v99
  %v850 = vpop.f32.mrf.mxu0
  %v851 = vadd.f32 %v769, %v850
  %v852 = vpop.f32.mrf.mxu0
  %853 = vmatprep.mubr.f32.mxu0 0.0
  %854 = vmatmul.mubr.f32.gmra.mxu0 %v102
  %v855 = vpop.f32.mrf.mxu0
  %v856 = vadd.f32 %v769, %v855
  %v857 = vpop.f32.mrf.mxu0
  %858 = vmatprep.mubr.f32.mxu0 0.0
  %859 = vmatmul.mubr.f32.gmra.mxu0 %v105
  %v860 = vpop.f32.mrf.mxu0
  %v861 = vadd.f32 %v769, %v860
  %v862 = vpop.f32.mrf.mxu0
  %863 = vmatprep.mubr.f32.mxu0 0.0
  %864 = vmatmul.mubr.f32.gmra.mxu0 %v108
  %v865 = vpop.f32.mrf.mxu0
  %v866 = vadd.f32 %v769, %v865
  %v867 = vpop.f32.mrf.mxu0
  %868 = vmatprep.mubr.f32.mxu0 0.0
  %869 = vmatmul.mubr.f32.gmra.mxu0 %v111
  %v870 = vpop.f32.mrf.mxu0
  %v871 = vadd.f32 %v769, %v870
  %v872 = vpop.f32.mrf.mxu0
  %873 = vmatprep.mubr.f32.mxu0 0.0
  %874 = vmatmul.mubr.f32.gmra.mxu0 %v114
  %v875 = vpop.f32.mrf.mxu0
  %v876 = vadd.f32 %v769, %v875
  %v877 = vpop.f32.mrf.mxu0
  %878 = vmatprep.mubr.f32.mxu0 0.0
  %879 = vmatmul.mubr.f32.gmra.mxu0 %v117
  %v880 = vpop.f32.mrf.mxu0
  %v881 = vadd.f32 %v769, %v880
  %v882 = vpop.f32.mrf.mxu0
  %883 = vmatprep.mubr.f32.mxu0 0.0
  %884 = vmatmul.mubr.f32.gmra.mxu0 %v120
  %v885 = vpop.f32.mrf.mxu0
  %v886 = vadd.f32 %v769, %v885
  %v887 = vpop.f32.mrf.mxu0
  %888 = vmatprep.mubr.f32.mxu0 0.0
  %889 = vmatmul.mubr.f32.gmra.mxu0 %v123
  %v890 = vpop.f32.mrf.mxu0
  %v891 = vadd.f32 %v769, %v890
  %v892 = vpop.f32.mrf.mxu0
  %893 = vmatprep.mubr.f32.mxu0 0.0
  %894 = vmatmul.mubr.f32.gmra.mxu0 %v126
  %v895 = vpop.f32.mrf.mxu0
  %v896 = vadd.f32 %v769, %v895
  %v897 = vpop.f32.mrf.mxu0
  %898 = vmatprep.mubr.f32.mxu0 0.0
  %899 = vmatmul.mubr.f32.gmra.mxu0 %v129
  %v900 = vpop.f32.mrf.mxu0
  %v901 = vadd.f32 %v769, %v900
  %v902 = vpop.f32.mrf.mxu0
  %903 = vmatprep.mubr.f32.mxu0 0.0
  %904 = vmatmul.mubr.f32.gmra.mxu0 %v132
  %v905 = vpop.f32.mrf.mxu0
  %v906 = vadd.f32 %v769, %v905
  %v907 = vpop.f32.mrf.mxu0
  %908 = vmatprep.mubr.f32.mxu0 0.0
  %909 = vmatmul.mubr.f32.gmra.mxu0 %v135
  %v910 = vpop.f32.mrf.mxu0
  %v911 = vadd.f32 %v769, %v910
  %v912 = vpop.f32.mrf.mxu0
  %913 = vmatprep.mubr.f32.mxu0 0.0
  %914 = vmatmul.mubr.f32.gmra.mxu0 %v138
  %v915 = vpop.f32.mrf.mxu0
  %v916 = vadd.f32 %v769, %v915
  %v917 = vpop.f32.mrf.mxu0
  %918 = vmatprep.mubr.f32.mxu0 0.0
  %919 = vmatmul.mubr.f32.gmra.mxu0 %v141
  %v920 = vpop.f32.mrf.mxu0
  %v921 = vadd.f32 %v769, %v920
  %v922 = vpop.f32.mrf.mxu0
  %923 = vmatprep.mubr.f32.mxu0 0.0
  %924 = vmatmul.mubr.f32.gmra.mxu0 %v144
  %v925 = vpop.f32.mrf.mxu0
  %v926 = vadd.f32 %v769, %v925
  %v927 = vpop.f32.mrf.mxu0
  %928 = vmatprep.mubr.f32.mxu0 0.0
  %929 = vmatmul.mubr.f32.gmra.mxu0 %v147
  %v930 = vpop.f32.mrf.mxu0
  %v931 = vadd.f32 %v769, %v930
  %v932 = vpop.f32.mrf.mxu0
  %933 = vmatprep.mubr.f32.mxu0 0.0
  %934 = vmatmul.mubr.f32.gmra.mxu0 %v150
  %v935 = vpop.f32.mrf.mxu0
  %v936 = vadd.f32 %v769, %v935
  %v937 = vpop.f32.mrf.mxu0
  %938 = vmatprep.mubr.f32.mxu0 0.0
  %939 = vmatmul.mubr.f32.gmra.mxu0 %v153
  %v940 = vpop.f32.mrf.mxu0
  %v941 = vadd.f32 %v769, %v940
  %v942 = vpop.f32.mrf.mxu0
  %943 = vmatprep.mubr.f32.mxu0 0.0
  %944 = vmatmul.mubr.f32.gmra.mxu0 %v156
  %v945 = vpop.f32.mrf.mxu0
  %v946 = vadd.f32 %v769, %v945
  %v947 = vpop.f32.mrf.mxu0
  %948 = vmatprep.mubr.f32.mxu0 0.0
  %949 = vmatmul.mubr.f32.gmra.mxu0 %v159
  %v950 = vpop.f32.mrf.mxu0
  %v951 = vadd.f32 %v769, %v950
  %v952 = vpop.f32.mrf.mxu0
  %953 = vmatprep.mubr.f32.mxu0 0.0
  %954 = vmatmul.mubr.f32.gmra.mxu0 %v162
  %v955 = vpop.f32.mrf.mxu0
  %v956 = vadd.f32 %v769, %v955
  %v957 = vpop.f32.mrf.mxu0
  %958 = vmatprep.mubr.f32.mxu0 0.0
  %959 = vmatmul.mubr.f32.gmra.mxu0 %v165
  %v960 = vpop.f32.mrf.mxu0
  %v961 = vadd.f32 %v769, %v960
  %v962 = vpop.f32.mrf.mxu0
  %963 = vmatprep.mubr.f32.mxu0 0.0
  %964 = vmatmul.mubr.f32.gmra.mxu0 %v168
  %v965 = vpop.f32.mrf.mxu0
  %v966 = vadd.f32 %v769, %v965
  %v967 = vpop.f32.mrf.mxu0
  %968 = vmatprep.mubr.f32.mxu0 0.0
  %969 = vmatmul.mubr.f32.gmra.mxu0 %v171
  %v970 = vpop.f32.mrf.mxu0
  %v971 = vadd.f32 %v769, %v970
  %v972 = vpop.f32.mrf.mxu0
  %973 = vmatprep.mubr.f32.mxu0 0.0
  %974 = vmatmul.mubr.f32.gmra.mxu0 %v174
  %v975 = vpop.f32.mrf.mxu0
  %v976 = vadd.f32 %v769, %v975
  %v977 = vpop.f32.mrf.mxu0
  %978 = vmatprep.mubr.f32.mxu0 0.0
  %979 = vmatmul.mubr.f32.gmra.mxu0 %v177
  %v980 = vpop.f32.mrf.mxu0
  %v981 = vadd.f32 %v769, %v980
  %v982 = vpop.f32.mrf.mxu0
  %983 = vmatprep.mubr.f32.mxu0 0.0
  %984 = vmatmul.mubr.f32.gmra.mxu0 %v180
  %v985 = vpop.f32.mrf.mxu0
  %v986 = vadd.f32 %v769, %v985
  %v987 = vpop.f32.mrf.mxu0
  %988 = vmatprep.mubr.f32.mxu0 0.0
  %989 = vmatmul.mubr.f32.gmra.mxu0 %v183
  %v990 = vpop.f32.mrf.mxu0
  %v991 = vadd.f32 %v769, %v990
  %v992 = vpop.f32.mrf.mxu0
  %993 = vmatprep.mubr.f32.mxu0 0.0
  %994 = vmatmul.mubr.f32.gmra.mxu0 %v186
  %v995 = vpop.f32.mrf.mxu0
  %v996 = vadd.f32 %v769, %v995
  %v997 = vpop.f32.mrf.mxu0
  %998 = vmatprep.mubr.f32.mxu0 0.0
  %999 = vmatmul.mubr.f32.gmra.mxu0 %v189
  %v1000 = vpop.f32.mrf.mxu0
  %v1001 = vadd.f32 %v769, %v1000
  %v1002 = vpop.f32.mrf.mxu0
  %1003 = vmatprep.mubr.f32.mxu0 0.0
  %1004 = vmatmul.mubr.f32.gmra.mxu0 %v192
  %v1005 = vpop.f32.mrf.mxu0
  %v1006 = vadd.f32 %v769, %v1005
  %v1007 = vpop.f32.mrf.mxu0
  %1008 = vmatprep.mubr.f32.mxu0 0.0
  %1009 = vmatmul.mubr.f32.gmra.mxu0 %v195
  %v1010 = vpop.f32.mrf.mxu0
  %v1011 = vadd.f32 %v769, %v1010
  %v1012 = vpop.f32.mrf.mxu0
  %1013 = vmatprep.mubr.f32.mxu0 0.0
  %1014 = vmatmul.mubr.f32.gmra.mxu0 %v198
  %v1015 = vpop.f32.mrf.mxu0
  %v1016 = vadd.f32 %v769, %v1015
  %v1017 = vpop.f32.mrf.mxu0
  %1018 = vmatprep.mubr.f32.mxu0 0.0
  %1019 = vmatmul.mubr.f32.gmra.mxu0 %v201
  %v1020 = vpop.f32.mrf.mxu0
  %v1021 = vadd.f32 %v769, %v1020
  %v1022 = vpop.f32.mrf.mxu0
  %1023 = vmatprep.mubr.f32.mxu0 0.0
  %1024 = vmatmul.mubr.f32.gmra.mxu0 %v204
  %v1025 = vpop.f32.mrf.mxu0
  %v1026 = vadd.f32 %v769, %v1025
  %v1027 = vpop.f32.mrf.mxu0
  %1028 = vmatprep.mubr.f32.mxu0 0.0
  %1029 = vmatmul.mubr.f32.gmra.mxu0 %v207
  %v1030 = vpop.f32.mrf.mxu0
  %v1031 = vadd.f32 %v769, %v1030
  %v1032 = vpop.f32.mrf.mxu0
  %1033 = vmatprep.mubr.f32.mxu0 0.0
  %1034 = vmatmul.mubr.f32.gmra.mxu0 %v210
  %v1035 = vpop.f32.mrf.mxu0
  %v1036 = vadd.f32 %v769, %v1035
  %v1037 = vpop.f32.mrf.mxu0
  %1038 = vmatprep.mubr.f32.mxu0 0.0
  %1039 = vmatmul.mubr.f32.gmra.mxu0 %v213
  %v1040 = vpop.f32.mrf.mxu0
  %v1041 = vadd.f32 %v769, %v1040
  %v1042 = vpop.f32.mrf.mxu0
  %1043 = vmatprep.mubr.f32.mxu0 0.0
  %1044 = vmatmul.mubr.f32.gmra.mxu0 %v216
  %v1045 = vpop.f32.mrf.mxu0
  %v1046 = vadd.f32 %v769, %v1045
  %v1047 = vpop.f32.mrf.mxu0
  %1048 = vmatprep.mubr.f32.mxu0 0.0
  %1049 = vmatmul.mubr.f32.gmra.mxu0 %v219
  %v1050 = vpop.f32.mrf.mxu0
  %v1051 = vadd.f32 %v769, %v1050
  %v1052 = vpop.f32.mrf.mxu0
  %1053 = vmatprep.mubr.f32.mxu0 0.0
  %1054 = vmatmul.mubr.f32.gmra.mxu0 %v222
  %v1055 = vpop.f32.mrf.mxu0
  %v1056 = vadd.f32 %v769, %v1055
  %v1057 = vpop.f32.mrf.mxu0
  %1058 = vmatprep.mubr.f32.mxu0 0.0
  %1059 = vmatmul.mubr.f32.gmra.mxu0 %v225
  %v1060 = vpop.f32.mrf.mxu0
  %v1061 = vadd.f32 %v769, %v1060
  %v1062 = vpop.f32.mrf.mxu0
  %1063 = vmatprep.mubr.f32.mxu0 0.0
  %1064 = vmatmul.mubr.f32.gmra.mxu0 %v228
  %v1065 = vpop.f32.mrf.mxu0
  %v1066 = vadd.f32 %v769, %v1065
  %v1067 = vpop.f32.mrf.mxu0
  %1068 = vmatprep.mubr.f32.mxu0 0.0
  %1069 = vmatmul.mubr.f32.gmra.mxu0 %v231
  %v1070 = vpop.f32.mrf.mxu0
  %v1071 = vadd.f32 %v769, %v1070
  %v1072 = vpop.f32.mrf.mxu0
  %1073 = vmatprep.mubr.f32.mxu0 0.0
  %1074 = vmatmul.mubr.f32.gmra.mxu0 %v234
  %v1075 = vpop.f32.mrf.mxu0
  %v1076 = vadd.f32 %v769, %v1075
  %v1077 = vpop.f32.mrf.mxu0
  %1078 = vmatprep.mubr.f32.mxu0 0.0
  %1079 = vmatmul.mubr.f32.gmra.mxu0 %v237
  %v1080 = vpop.f32.mrf.mxu0
  %v1081 = vadd.f32 %v769, %v1080
  %v1082 = vpop.f32.mrf.mxu0
  %1083 = vmatprep.mubr.f32.mxu0 0.0
  %1084 = vmatmul.mubr.f32.gmra.mxu0 %v240
  %v1085 = vpop.f32.mrf.mxu0
  %v1086 = vadd.f32 %v769, %v1085
  %v1087 = vpop.f32.mrf.mxu0
  %1088 = vmatprep.mubr.f32.mxu0 0.0
  %1089 = vmatmul.mubr.f32.gmra.mxu0 %v243
  %v1090 = vpop.f32.mrf.mxu0
  %v1091 = vadd.f32 %v769, %v1090
  %v1092 = vpop.f32.mrf.mxu0
  %1093 = vmatprep.mubr.f32.mxu0 0.0
  %1094 = vmatmul.mubr.f32.gmra.mxu0 %v246
  %v1095 = vpop.f32.mrf.mxu0
  %v1096 = vadd.f32 %v769, %v1095
  %v1097 = vpop.f32.mrf.mxu0
  %1098 = vmatprep.mubr.f32.mxu0 0.0
  %1099 = vmatmul.mubr.f32.gmra.mxu0 %v249
  %v1100 = vpop.f32.mrf.mxu0
  %v1101 = vadd.f32 %v769, %v1100
  %v1102 = vpop.f32.mrf.mxu0
  %1103 = vmatprep.mubr.f32.mxu0 0.0
  %1104 = vmatmul.mubr.f32.gmra.mxu0 %v252
  %v1105 = vpop.f32.mrf.mxu0
  %v1106 = vadd.f32 %v769, %v1105
  %v1107 = vpop.f32.mrf.mxu0
  %1108 = vmatprep.mubr.f32.mxu0 0.0
  %1109 = vmatmul.mubr.f32.gmra.mxu0 %v255
  %v1110 = vpop.f32.mrf.mxu0
  %v1111 = vadd.f32 %v769, %v1110
  %v1112 = vpop.f32.mrf.mxu0
  %1113 = vmatprep.mubr.f32.mxu0 0.0
  %1114 = vmatmul.mubr.f32.gmra.mxu0 %v258
  %v1115 = vpop.f32.mrf.mxu0
  %v1116 = vadd.f32 %v769, %v1115
  %v1117 = vpop.f32.mrf.mxu0
  %1118 = vmatprep.mubr.f32.mxu0 0.0
  %1119 = vmatmul.mubr.f32.gmra.mxu0 %v261
  %v1120 = vpop.f32.mrf.mxu0
  %v1121 = vadd.f32 %v769, %v1120
  %v1122 = vpop.f32.mrf.mxu0
  %1123 = vmatprep.mubr.f32.mxu0 0.0
  %1124 = vmatmul.mubr.f32.gmra.mxu0 %v264
  %v1125 = vpop.f32.mrf.mxu0
  %v1126 = vadd.f32 %v769, %v1125
  %v1127 = vpop.f32.mrf.mxu0
  %1128 = vmatprep.mubr.f32.mxu0 0.0
  %1129 = vmatmul.mubr.f32.gmra.mxu0 %v267
  %v1130 = vpop.f32.mrf.mxu0
  %v1131 = vadd.f32 %v769, %v1130
  %v1132 = vpop.f32.mrf.mxu0
  %1133 = vmatprep.mubr.f32.mxu0 0.0
  %1134 = vmatmul.mubr.f32.gmra.mxu0 %v270
  %v1135 = vpop.f32.mrf.mxu0
  %v1136 = vadd.f32 %v769, %v1135
  %v1137 = vpop.f32.mrf.mxu0
  %1138 = vdwg.mxu0
  %v1139 = vmax.f32 %v841, 0.0
  %v1140 = vmax.f32 %v846, 0.0
  %v1141 = vmax.f32 %v851, 0.0
  %v1142 = vmax.f32 %v856, 0.0
  %v1143 = vmax.f32 %v861, 0.0
  %v1144 = vmax.f32 %v866, 0.0
  %v1145 = vmax.f32 %v871, 0.0
  %v1146 = vmax.f32 %v876, 0.0
  %v1147 = vmax.f32 %v881, 0.0
  %v1148 = vmax.f32 %v886, 0.0
  %v1149 = vmax.f32 %v891, 0.0
  %v1150 = vmax.f32 %v896, 0.0
  %v1151 = vmax.f32 %v901, 0.0
  %v1152 = vmax.f32 %v906, 0.0
  %v1153 = vmax.f32 %v911, 0.0
  %v1154 = vmax.f32 %v916, 0.0
  %v1155 = vmax.f32 %v921, 0.0
  %v1156 = vmax.f32 %v926, 0.0
  %v1157 = vmax.f32 %v931, 0.0
  %v1158 = vmax.f32 %v936, 0.0
  %v1159 = vmax.f32 %v941, 0.0
  %v1160 = vmax.f32 %v946, 0.0
  %v1161 = vmax.f32 %v951, 0.0
  %v1162 = vmax.f32 %v956, 0.0
  %v1163 = vmax.f32 %v961, 0.0
  %v1164 = vmax.f32 %v966, 0.0
  %v1165 = vmax.f32 %v971, 0.0
  %v1166 = vmax.f32 %v976, 0.0
  %v1167 = vmax.f32 %v981, 0.0
  %v1168 = vmax.f32 %v986, 0.0
  %v1169 = vmax.f32 %v991, 0.0
  %v1170 = vmax.f32 %v996, 0.0
  %v1171 = vmax.f32 %v1001, 0.0
  %v1172 = vmax.f32 %v1006, 0.0
  %v1173 = vmax.f32 %v1011, 0.0
  %v1174 = vmax.f32 %v1016, 0.0
  %v1175 = vmax.f32 %v1021, 0.0
  %v1176 = vmax.f32 %v1026, 0.0
  %v1177 = vmax.f32 %v1031, 0.0
  %v1178 = vmax.f32 %v1036, 0.0
  %v1179 = vmax.f32 %v1041, 0.0
  %v1180 = vmax.f32 %v1046, 0.0
  %v1181 = vmax.f32 %v1051, 0.0
  %v1182 = vmax.f32 %v1056, 0.0
  %v1183 = vmax.f32 %v1061, 0.0
  %v1184 = vmax.f32 %v1066, 0.0
  %v1185 = vmax.f32 %v1071, 0.0
  %v1186 = vmax.f32 %v1076, 0.0
  %v1187 = vmax.f32 %v1081, 0.0
  %v1188 = vmax.f32 %v1086, 0.0
  %v1189 = vmax.f32 %v1091, 0.0
  %v1190 = vmax.f32 %v1096, 0.0
  %v1191 = vmax.f32 %v1101, 0.0
  %v1192 = vmax.f32 %v1106, 0.0
  %v1193 = vmax.f32 %v1111, 0.0
  %v1194 = vmax.f32 %v1116, 0.0
  %v1195 = vmax.f32 %v1121, 0.0
  %v1196 = vmax.f32 %v1126, 0.0
  %v1197 = vmax.f32 %v1131, 0.0
  %v1198 = vmax.f32 %v1136, 0.0
  %1199 = vst.msk [vmem:[%s6] sm:$0xff] %vm701, %v1139
  %1200 = vst.msk [vmem:[%s6 + $0x8] sm:$0xff] %vm701, %v1140
  %1201 = vst.msk [vmem:[%s6 + $0x10] sm:$0xff] %vm701, %v1141
  %1202 = vst.msk [vmem:[%s6 + $0x18] sm:$0xff] %vm701, %v1142
  %1203 = vst.msk [vmem:[%s6 + $0x20] sm:$0xff] %vm701, %v1143
  %1204 = vst.msk [vmem:[%s6 + $0x28] sm:$0xff] %vm701, %v1144
  %1205 = vst.msk [vmem:[%s6 + $0x30] sm:$0xff] %vm701, %v1145
  %1206 = vst.msk [vmem:[%s6 + $0x38] sm:$0xff] %vm701, %v1146
  %1207 = vst.msk [vmem:[%s6 + $0x40] sm:$0xff] %vm701, %v1147
  %1208 = vst.msk [vmem:[%s6 + $0x48] sm:$0xff] %vm701, %v1148
  %1209 = vst.msk [vmem:[%s6 + $0x50] sm:$0xff] %vm701, %v1149
  %1210 = vst.msk [vmem:[%s6 + $0x58] sm:$0xff] %vm701, %v1150
  %1211 = vst.msk [vmem:[%s6 + $0x60] sm:$0xff] %vm701, %v1151
  %1212 = vst.msk [vmem:[%s6 + $0x68] sm:$0xff] %vm701, %v1152
  %1213 = vst.msk [vmem:[%s6 + $0x70] sm:$0xff] %vm701, %v1153
  %1214 = vst.msk [vmem:[%s6 + $0x78] sm:$0xff] %vm701, %v1154
  %1215 = vst.msk [vmem:[%s6 + $0x80] sm:$0xff] %vm701, %v1155
  %1216 = vst.msk [vmem:[%s6 + $0x88] sm:$0xff] %vm701, %v1156
  %1217 = vst.msk [vmem:[%s6 + $0x90] sm:$0xff] %vm701, %v1157
  %1218 = vst.msk [vmem:[%s6 + $0x98] sm:$0xff] %vm701, %v1158
  %1219 = vst.msk [vmem:[%s6 + $0xa0] sm:$0xff] %vm701, %v1159
  %1220 = vst.msk [vmem:[%s6 + $0xa8] sm:$0xff] %vm701, %v1160
  %1221 = vst.msk [vmem:[%s6 + $0xb0] sm:$0xff] %vm701, %v1161
  %1222 = vst.msk [vmem:[%s6 + $0xb8] sm:$0xff] %vm701, %v1162
  %1223 = vst.msk [vmem:[%s6 + $0xc0] sm:$0xff] %vm701, %v1163
  %1224 = vst.msk [vmem:[%s6 + $0xc8] sm:$0xff] %vm701, %v1164
  %1225 = vst.msk [vmem:[%s6 + $0xd0] sm:$0xff] %vm701, %v1165
  %1226 = vst.msk [vmem:[%s6 + $0xd8] sm:$0xff] %vm701, %v1166
  %1227 = vst.msk [vmem:[%s6 + $0xe0] sm:$0xff] %vm701, %v1167
  %1228 = vst.msk [vmem:[%s6 + $0xe8] sm:$0xff] %vm701, %v1168
  %1229 = vst.msk [vmem:[%s6 + $0xf0] sm:$0xff] %vm701, %v1169
  %1230 = vst.msk [vmem:[%s6 + $0xf8] sm:$0xff] %vm701, %v1170
  %1231 = vst.msk [vmem:[%s6 + $0x100] sm:$0xff] %vm701, %v1171
  %1232 = vst.msk [vmem:[%s6 + $0x108] sm:$0xff] %vm701, %v1172
  %1233 = vst.msk [vmem:[%s6 + $0x110] sm:$0xff] %vm701, %v1173
  %1234 = vst.msk [vmem:[%s6 + $0x118] sm:$0xff] %vm701, %v1174
  %1235 = vst.msk [vmem:[%s6 + $0x120] sm:$0xff] %vm701, %v1175
  %1236 = vst.msk [vmem:[%s6 + $0x128] sm:$0xff] %vm701, %v1176
  %1237 = vst.msk [vmem:[%s6 + $0x130] sm:$0xff] %vm701, %v1177
  %1238 = vst.msk [vmem:[%s6 + $0x138] sm:$0xff] %vm701, %v1178
  %1239 = vst.msk [vmem:[%s6 + $0x140] sm:$0xff] %vm701, %v1179
  %1240 = vst.msk [vmem:[%s6 + $0x148] sm:$0xff] %vm701, %v1180
  %1241 = vst.msk [vmem:[%s6 + $0x150] sm:$0xff] %vm701, %v1181
  %1242 = vst.msk [vmem:[%s6 + $0x158] sm:$0xff] %vm701, %v1182
  %1243 = vst.msk [vmem:[%s6 + $0x160] sm:$0xff] %vm701, %v1183
  %1244 = vst.msk [vmem:[%s6 + $0x168] sm:$0xff] %vm701, %v1184
  %1245 = vst.msk [vmem:[%s6 + $0x170] sm:$0xff] %vm701, %v1185
  %1246 = vst.msk [vmem:[%s6 + $0x178] sm:$0xff] %vm701, %v1186
  %1247 = vst.msk [vmem:[%s6 + $0x180] sm:$0xff] %vm701, %v1187
  %1248 = vst.msk [vmem:[%s6 + $0x188] sm:$0xff] %vm701, %v1188
  %1249 = vst.msk [vmem:[%s6 + $0x190] sm:$0xff] %vm701, %v1189
  %1250 = vst.msk [vmem:[%s6 + $0x198] sm:$0xff] %vm701, %v1190
  %1251 = vst.msk [vmem:[%s6 + $0x1a0] sm:$0xff] %vm701, %v1191
  %1252 = vst.msk [vmem:[%s6 + $0x1a8] sm:$0xff] %vm701, %v1192
  %1253 = vst.msk [vmem:[%s6 + $0x1b0] sm:$0xff] %vm701, %v1193
  %1254 = vst.msk [vmem:[%s6 + $0x1b8] sm:$0xff] %vm701, %v1194
  %1255 = vst.msk [vmem:[%s6 + $0x1c0] sm:$0xff] %vm701, %v1195
  %1256 = vst.msk [vmem:[%s6 + $0x1c8] sm:$0xff] %vm701, %v1196
  %1257 = vst.msk [vmem:[%s6 + $0x1d0] sm:$0xff] %vm701, %v1197
  %1258 = vst.msk [vmem:[%s6 + $0x1d8] sm:$0xff] %vm701, %v1198
  // Predicated region
  $region22: #{tpu_custom_call.1} parent=0 // pred_check
    _
  $region23: #{tpu_custom_call.1} parent=0 // pred_check_branch
    %1260 = sbr.rel (0) target = $region25
  $region24: #{tpu_custom_call.1} parent=0 // pred_region
    _
  $region25: #{tpu_custom_call.1} parent=0 // pred_fallthru
    _
  // Predicated region
  $region26: #{tpu_custom_call.1} parent=0 // pred_check
    _
  $region27: #{tpu_custom_call.1} parent=0 // pred_check_branch
    %1262 = sbr.rel (0) target = $region29
  $region28: #{tpu_custom_call.1} parent=0 // pred_region
    _
  $region29: #{tpu_custom_call.1} parent=0 // pred_fallthru
    _
  // Predicated region
  $region30: #{tpu_custom_call.1} parent=0 // pred_check
    _
  $region31: #{tpu_custom_call.1} parent=0 // pred_check_branch
    %1264 = sbr.rel (0) target = $region33
  $region32: #{tpu_custom_call.1} parent=0 // pred_region
    _
  $region33: #{tpu_custom_call.1} parent=0 // pred_fallthru
    _
  // Predicated region
  $region34: #{tpu_custom_call.1} parent=0 // pred_check
    _
  $region35: #{tpu_custom_call.1} parent=0 // pred_check_branch
    %1266 = sbr.rel (0) target = $region37
  $region36: #{tpu_custom_call.1} parent=0 // pred_region
    _
  $region37: #{tpu_custom_call.1} parent=0 // pred_fallthru
    _

</llo_original>
